<compile_context>
chip_gen: v6e
topology: v6e:2x2x1
jax: 0.10.0
libtpu: 0.0.40
codegen_flags: <defaults>
</compile_context>

<pallas_src>
import math
import functools

import jax
import jax.numpy as jnp
from jax.experimental import pallas as pl
from jax.experimental.pallas import tpu as pltpu


def _attention_model_kernel(xr_ref, xc_ref, hd_ref, dh_ref, w1_ref, tail_ref,
                            o_ref):
    xr = xr_ref[...]                     # (bb, 1, D)  x with D on lanes
    xc = xc_ref[...]                     # (bb, D, 1)  x with D on sublanes
    tail = tail_ref[...]                 # (3, H): [b1, wo, bo]

    # diag(x) @ W^T == x[:, None] * W^T, so Q/K are pure VPU multiplies.
    # hd_ref[0] = Wq*scale (H,D), hd_ref[1] = bq*scale broadcast to (H,D):
    # builds Q^T directly in (H, D) layout (no in-kernel transpose).
    qT = xr * hd_ref[0] + hd_ref[1]                      # (bb, H, D)
    # dh_ref[0] = Wk^T (D,H), dh_ref[1] = bk broadcast to (D,H).
    k = xc * dh_ref[0] + dh_ref[1]                       # (bb, D, H)

    # scores[b] = (Q/sqrt(H))^T @ K — canonical batched MXU matmul.
    scores = jnp.einsum('bhd,bdk->bhk', qT, k,
                        preferred_element_type=jnp.float32)   # (bb, H, H)

    # Numerically-stable softmax pieces (normalisation folded into v_mean).
    m = jnp.max(scores, axis=-1, keepdims=True)
    e = jnp.exp(scores - m)                                    # (bb, H, H)
    denom = jnp.sum(e, axis=-1, keepdims=True)                 # (bb, H, 1)

    # v_mean[b,h] = mean_d V[b,d,h] = sum_d (x_d*Wv[h,d]/D + bv[h]/D).
    # hd_ref[2] = Wv/D (H,D), hd_ref[3] = (bv/D) broadcast to (H,D).
    vm = jnp.sum(xr * hd_ref[2] + hd_ref[3],
                 axis=-1, keepdims=True)                       # (bb, H, 1)

    # pooled[b,k] = sum_h attn[b,h,k] * v_mean[b,h]
    #            = sum_h e[b,h,k] * (v_mean[b,h] / denom[b,h])
    pooled = jnp.sum(e * (vm / denom), axis=1)                 # (bb, H)

    # fc1 + exact GELU (erf form, matches torch.nn.GELU default).
    h = jnp.dot(pooled, w1_ref[...],
                preferred_element_type=jnp.float32) + tail[0:1, :]
    h = 0.5 * h * (1.0 + jax.lax.erf(h * (1.0 / math.sqrt(2.0))))

    # Output head: N=1, so a VPU multiply + lane reduce beats a degenerate
    # MXU matmul.
    y = jnp.sum(h * tail[1:2, :], axis=-1, keepdims=True) + tail[2:3, 0:1]
    o_ref[...] = y                                             # (bb, 1)


def prepare_params(params):
    """One-time layout prep: transposes, scale/mean folds, bias broadcasts,
    and packing into few constant slabs (fewer, larger DMAs)."""
    wq, bq, wk, bk, wv, bv, w1, b1, wo, bo = params
    H, D = wq.shape
    scale = 1.0 / math.sqrt(H)            # attention scale folded into Q proj

    hd_pack = jnp.stack([                 # (4, H, D), all in (H, D) layout
        wq * scale,
        jnp.broadcast_to((bq * scale)[:, None], (H, D)),
        wv / D,                           # mean over D folded into V weights
        jnp.broadcast_to((bv / D)[:, None], (H, D)),
    ])
    dh_pack = jnp.stack([                 # (2, D, H)
        wk.T,
        jnp.broadcast_to(bk[None, :], (D, H)),
    ])
    w1_t = w1.T                           # (H, H)
    tail = jnp.stack([                    # (3, H): [b1, wo, bo]
        b1,
        wo.reshape(H),
        jnp.broadcast_to(bo.reshape(1), (H,)),
    ])
    return (hd_pack, dh_pack, w1_t, tail)


def attention_model_forward(x, prepared, *, batch_block=None):
    """x: (B, D) f32, prepared = prepare_params(params). Returns (B,) f32.

    batch_block: rows per grid step. Default: whole batch in one step
    (best on single-TensorCore v5e/v6e); on v7x it defaults to B//2 so both
    TensorCores get a "parallel" step (and vreg pressure is halved).
    """
    B, D = x.shape
    hd_pack, dh_pack, w1_t, tail = prepared

    if batch_block is None:
        bb = B
        try:
            kind = jax.devices()[0].device_kind.lower()
            if "v7" in kind and B % 2 == 0 and B >= 2:
                bb = B // 2               # split batch across the two TCs
        except Exception:
            bb = B
    else:
        bb = batch_block
    assert B % bb == 0
    nb = B // bb

    # Tiny per-call glue: present x in both broadcast-friendly layouts.
    x_row3 = x.reshape(B, 1, D)           # D on lanes   (Q^T / v_mean build)
    x_col3 = x.reshape(B, D, 1)           # D on sublanes (K build)

    def const_spec(arr):
        if arr.ndim == 2:
            return pl.BlockSpec(arr.shape, lambda i: (0, 0))
        return pl.BlockSpec(arr.shape, lambda i: (0, 0, 0))

    out = pl.pallas_call(
        _attention_model_kernel,
        out_shape=jax.ShapeDtypeStruct((nb, bb, 1), jnp.float32),
        grid_spec=pltpu.PrefetchScalarGridSpec(
            num_scalar_prefetch=0,
            grid=(nb,),
            in_specs=[
                pl.BlockSpec((bb, 1, D), lambda i: (i, 0, 0)),
                pl.BlockSpec((bb, D, 1), lambda i: (i, 0, 0)),
                const_spec(hd_pack),
                const_spec(dh_pack),
                const_spec(w1_t),
                const_spec(tail),
            ],
            out_specs=pl.BlockSpec((None, bb, 1), lambda i: (i, 0, 0)),
        ),
        compiler_params=pltpu.CompilerParams(
            dimension_semantics=("parallel",)),
    )(x_row3, x_col3, hd_pack, dh_pack, w1_t, tail)

    return out.reshape(B)


def init_params(key, input_dim, hidden_dim):
    """Deterministic PyTorch-style (uniform +/- 1/sqrt(fan_in)) init."""
    ks = jax.random.split(key, 10)

    def lin(kw, kb, fan_in, fan_out):
        bound = 1.0 / math.sqrt(fan_in)
        w = jax.random.uniform(kw, (fan_out, fan_in), jnp.float32, -bound, bound)
        b = jax.random.uniform(kb, (fan_out,), jnp.float32, -bound, bound)
        return w, b

    wq, bq = lin(ks[0], ks[1], input_dim, hidden_dim)
    wk, bk = lin(ks[2], ks[3], input_dim, hidden_dim)
    wv, bv = lin(ks[4], ks[5], input_dim, hidden_dim)
    w1, b1 = lin(ks[6], ks[7], hidden_dim, hidden_dim)
    wo, bo = lin(ks[8], ks[9], hidden_dim, 1)
    return (wq, bq, wk, bk, wv, bv, w1, b1, wo, bo)


def reference_forward(x, params):
    """Pure-JAX reference mirroring the PyTorch module, for validation."""
    wq, bq, wk, bk, wv, bv, w1, b1, wo, bo = params
    H = wq.shape[0]
    x_diag = jax.vmap(jnp.diag)(x)                        # (B, D, D)
    Q = x_diag @ wq.T + bq                                # (B, D, H)
    K = x_diag @ wk.T + bk
    V = x_diag @ wv.T + bv
    scores = jnp.einsum("bdh,bdk->bhk", Q, K) / math.sqrt(H)
    attn = jax.nn.softmax(scores, axis=-1)                # (B, H, H)
    out = jnp.einsum("bdh,bhk->bdk", V, attn)             # (B, D, H)
    pooled = out.mean(axis=1)                             # (B, H)
    h = pooled @ w1.T + b1
    h = 0.5 * h * (1.0 + jax.lax.erf(h / math.sqrt(2.0)))
    y = h @ wo.T + bo                                     # (B, 1)
    return y[:, 0]


if __name__ == "__main__":
    input_dim, hidden_dim, batch = 19, 63, 4

    key = jax.random.PRNGKey(0)
    k_x, k_p = jax.random.split(key)
    x = jax.random.normal(k_x, (batch, input_dim), jnp.float32)
    params = init_params(k_p, input_dim, hidden_dim)

    prepared = prepare_params(params)                # one-time layout prep
    fwd = jax.jit(functools.partial(attention_model_forward, prepared=prepared))

    y = fwd(x)
    y = jax.block_until_ready(y)

    y_ref = reference_forward(x, params)
    assert y.shape == (batch,)
    assert jnp.allclose(y, y_ref, rtol=1e-3, atol=1e-3), (y, y_ref)

    print("KERNEL_OK")
</pallas_src>

<mosaic_0001>
module attributes {stable_mosaic.version = 11 : i64} {
  func.func @_attention_model_kernel(%arg0: i32, %arg1: memref<4x1x19xf32, #tpu.memory_space<vmem>>, %arg2: memref<4x19x1xf32, #tpu.memory_space<vmem>>, %arg3: memref<4x63x19xf32, #tpu.memory_space<vmem>>, %arg4: memref<2x19x63xf32, #tpu.memory_space<vmem>>, %arg5: memref<63x63xf32, #tpu.memory_space<vmem>>, %arg6: memref<3x63xf32, #tpu.memory_space<vmem>>, %arg7: memref<1x4x1xf32, #tpu.memory_space<vmem>>) attributes {dimension_semantics = [#tpu.dimension_semantics<parallel>], iteration_bounds = array<i64: 1>, scalar_prefetch = 0 : i64, scratch_operands = 0 : i64, tpu.core_type = #tpu.core_type<tc>, window_params = [{transform_indices = @transform_0, window_bounds = array<i64: 4, 1, 19>}, {transform_indices = @transform_1, window_bounds = array<i64: 4, 19, 1>}, {pipeline_mode = #tpu.pipeline_mode<synchronous>, transform_indices = @transform_2, window_bounds = array<i64: 4, 63, 19>}, {pipeline_mode = #tpu.pipeline_mode<synchronous>, transform_indices = @transform_3, window_bounds = array<i64: 2, 19, 63>}, {pipeline_mode = #tpu.pipeline_mode<synchronous>, transform_indices = @transform_4, window_bounds = array<i64: 63, 63>}, {pipeline_mode = #tpu.pipeline_mode<synchronous>, transform_indices = @transform_5, window_bounds = array<i64: 3, 63>}, {transform_indices = @transform_6, window_bounds = array<i64: 1, 4, 1>}]} {
    %c0 = arith.constant 0 : index
    %c0_0 = arith.constant 0 : index
    %c0_1 = arith.constant 0 : index
    %0 = vector.load %arg1[%c0, %c0_0, %c0_1] : memref<4x1x19xf32, #tpu.memory_space<vmem>>, vector<4x1x19xf32>
    %c0_2 = arith.constant 0 : index
    %c0_3 = arith.constant 0 : index
    %c0_4 = arith.constant 0 : index
    %1 = vector.load %arg2[%c0_2, %c0_3, %c0_4] : memref<4x19x1xf32, #tpu.memory_space<vmem>>, vector<4x19x1xf32>
    %c0_5 = arith.constant 0 : index
    %c0_6 = arith.constant 0 : index
    %2 = vector.load %arg6[%c0_5, %c0_6] : memref<3x63xf32, #tpu.memory_space<vmem>>, vector<3x63xf32>
    %c0_7 = arith.constant 0 : index
    %c0_8 = arith.constant 0 : index
    %c0_9 = arith.constant 0 : index
    %3 = vector.load %arg3[%c0_7, %c0_8, %c0_9] : memref<4x63x19xf32, #tpu.memory_space<vmem>>, vector<1x63x19xf32>
    %4 = vector.shape_cast %3 : vector<1x63x19xf32> to vector<63x19xf32>
    %5 = vector.shape_cast %4 : vector<63x19xf32> to vector<1x63x19xf32>
    %6 = vector.broadcast %0 : vector<4x1x19xf32> to vector<4x63x19xf32>
    %7 = vector.broadcast %5 : vector<1x63x19xf32> to vector<4x63x19xf32>
    %8 = arith.mulf %6, %7 : vector<4x63x19xf32>
    %c1 = arith.constant 1 : index
    %c0_10 = arith.constant 0 : index
    %c0_11 = arith.constant 0 : index
    %9 = vector.load %arg3[%c1, %c0_10, %c0_11] : memref<4x63x19xf32, #tpu.memory_space<vmem>>, vector<1x63x19xf32>
    %10 = vector.shape_cast %9 : vector<1x63x19xf32> to vector<63x19xf32>
    %11 = vector.shape_cast %10 : vector<63x19xf32> to vector<1x63x19xf32>
    %12 = vector.broadcast %11 : vector<1x63x19xf32> to vector<4x63x19xf32>
    %13 = arith.addf %8, %12 : vector<4x63x19xf32>
    %c0_12 = arith.constant 0 : index
    %c0_13 = arith.constant 0 : index
    %c0_14 = arith.constant 0 : index
    %14 = vector.load %arg4[%c0_12, %c0_13, %c0_14] : memref<2x19x63xf32, #tpu.memory_space<vmem>>, vector<1x19x63xf32>
    %15 = vector.shape_cast %14 : vector<1x19x63xf32> to vector<19x63xf32>
    %16 = vector.shape_cast %15 : vector<19x63xf32> to vector<1x19x63xf32>
    %17 = vector.broadcast %1 : vector<4x19x1xf32> to vector<4x19x63xf32>
    %18 = vector.broadcast %16 : vector<1x19x63xf32> to vector<4x19x63xf32>
    %19 = arith.mulf %17, %18 : vector<4x19x63xf32>
    %c1_15 = arith.constant 1 : index
    %c0_16 = arith.constant 0 : index
    %c0_17 = arith.constant 0 : index
    %20 = vector.load %arg4[%c1_15, %c0_16, %c0_17] : memref<2x19x63xf32, #tpu.memory_space<vmem>>, vector<1x19x63xf32>
    %21 = vector.shape_cast %20 : vector<1x19x63xf32> to vector<19x63xf32>
    %22 = vector.shape_cast %21 : vector<19x63xf32> to vector<1x19x63xf32>
    %23 = vector.broadcast %22 : vector<1x19x63xf32> to vector<4x19x63xf32>
    %24 = arith.addf %19, %23 : vector<4x19x63xf32>
    "tpu.trace_start"() <{level = 10 : i32, message = "bhd,bdk->bhk"}> : () -> ()
    %cst = arith.constant dense<0.000000e+00> : vector<4x63x63xf32>
    %25 = tpu.matmul %13, %24, %cst {dimension_numbers = #tpu.dot_dimension_numbers<[2], [1], [1], [2], [0, 0, 0, 1, 1, 2], [0], [0]>} : vector<4x63x19xf32>, vector<4x19x63xf32>, vector<4x63x63xf32> -> vector<4x63x63xf32>
    "tpu.trace_stop"() : () -> ()
    %cst_18 = arith.constant dense<0xFF800000> : vector<4x63xf32>
    %26 = vector.multi_reduction <maximumf>, %25, %cst_18 [2] : vector<4x63x63xf32> to vector<4x63xf32>
    %27 = vector.shape_cast %26 : vector<4x63xf32> to vector<4x63x1xf32>
    %28 = vector.broadcast %27 : vector<4x63x1xf32> to vector<4x63x63xf32>
    %29 = arith.subf %25, %28 : vector<4x63x63xf32>
    %30 = math.exp %29 : vector<4x63x63xf32>
    %cst_19 = arith.constant dense<0.000000e+00> : vector<4x63xf32>
    %31 = vector.multi_reduction <add>, %30, %cst_19 [2] : vector<4x63x63xf32> to vector<4x63xf32>
    %32 = vector.shape_cast %31 : vector<4x63xf32> to vector<4x63x1xf32>
    %c2 = arith.constant 2 : index
    %c0_20 = arith.constant 0 : index
    %c0_21 = arith.constant 0 : index
    %33 = vector.load %arg3[%c2, %c0_20, %c0_21] : memref<4x63x19xf32, #tpu.memory_space<vmem>>, vector<1x63x19xf32>
    %34 = vector.shape_cast %33 : vector<1x63x19xf32> to vector<63x19xf32>
    %35 = vector.shape_cast %34 : vector<63x19xf32> to vector<1x63x19xf32>
    %36 = vector.broadcast %0 : vector<4x1x19xf32> to vector<4x63x19xf32>
    %37 = vector.broadcast %35 : vector<1x63x19xf32> to vector<4x63x19xf32>
    %38 = arith.mulf %36, %37 : vector<4x63x19xf32>
    %c3 = arith.constant 3 : index
    %c0_22 = arith.constant 0 : index
    %c0_23 = arith.constant 0 : index
    %39 = vector.load %arg3[%c3, %c0_22, %c0_23] : memref<4x63x19xf32, #tpu.memory_space<vmem>>, vector<1x63x19xf32>
    %40 = vector.shape_cast %39 : vector<1x63x19xf32> to vector<63x19xf32>
    %41 = vector.shape_cast %40 : vector<63x19xf32> to vector<1x63x19xf32>
    %42 = vector.broadcast %41 : vector<1x63x19xf32> to vector<4x63x19xf32>
    %43 = arith.addf %38, %42 : vector<4x63x19xf32>
    %cst_24 = arith.constant dense<0.000000e+00> : vector<4x63xf32>
    %44 = vector.multi_reduction <add>, %43, %cst_24 [2] : vector<4x63x19xf32> to vector<4x63xf32>
    %45 = vector.shape_cast %44 : vector<4x63xf32> to vector<4x63x1xf32>
    %46 = arith.divf %45, %32 : vector<4x63x1xf32>
    %47 = vector.broadcast %46 : vector<4x63x1xf32> to vector<4x63x63xf32>
    %48 = arith.mulf %30, %47 : vector<4x63x63xf32>
    %cst_25 = arith.constant dense<0.000000e+00> : vector<4x63xf32>
    %49 = vector.multi_reduction <add>, %48, %cst_25 [1] : vector<4x63x63xf32> to vector<4x63xf32>
    %c0_26 = arith.constant 0 : index
    %c0_27 = arith.constant 0 : index
    %50 = vector.load %arg5[%c0_26, %c0_27] : memref<63x63xf32, #tpu.memory_space<vmem>>, vector<63x63xf32>
    %cst_28 = arith.constant dense<0.000000e+00> : vector<4x63xf32>
    %51 = tpu.matmul %49, %50, %cst_28 {dimension_numbers = #tpu.dot_dimension_numbers<[1], [0], [0], [1], [0, 0, 1, 1], [], []>} : vector<4x63xf32>, vector<63x63xf32>, vector<4x63xf32> -> vector<4x63xf32>
    %52 = vector.extract_strided_slice %2 {offsets = [0, 0], sizes = [1, 63], strides = [1, 1]} : vector<3x63xf32> to vector<1x63xf32>
    %53 = vector.broadcast %52 : vector<1x63xf32> to vector<4x63xf32>
    %54 = arith.addf %51, %53 : vector<4x63xf32>
    %cst_29 = arith.constant 5.000000e-01 : f32
    %55 = vector.broadcast %cst_29 : f32 to vector<4x63xf32>
    %56 = arith.mulf %55, %54 : vector<4x63xf32>
    %cst_30 = arith.constant 0.707106769 : f32
    %57 = vector.broadcast %cst_30 : f32 to vector<4x63xf32>
    %58 = arith.mulf %54, %57 : vector<4x63xf32>
    %59 = math.erf %58 : vector<4x63xf32>
    %cst_31 = arith.constant 1.000000e+00 : f32
    %60 = vector.broadcast %cst_31 : f32 to vector<4x63xf32>
    %61 = arith.addf %60, %59 : vector<4x63xf32>
    %62 = arith.mulf %56, %61 : vector<4x63xf32>
    %63 = vector.extract_strided_slice %2 {offsets = [1, 0], sizes = [1, 63], strides = [1, 1]} : vector<3x63xf32> to vector<1x63xf32>
    %64 = vector.broadcast %63 : vector<1x63xf32> to vector<4x63xf32>
    %65 = arith.mulf %62, %64 : vector<4x63xf32>
    %cst_32 = arith.constant dense<0.000000e+00> : vector<4xf32>
    %66 = vector.multi_reduction <add>, %65, %cst_32 [1] : vector<4x63xf32> to vector<4xf32>
    %67 = vector.shape_cast %66 : vector<4xf32> to vector<4x1xf32>
    %68 = vector.extract_strided_slice %2 {offsets = [2, 0], sizes = [1, 1], strides = [1, 1]} : vector<3x63xf32> to vector<1x1xf32>
    %69 = vector.broadcast %68 : vector<1x1xf32> to vector<4x1xf32>
    %70 = arith.addf %67, %69 : vector<4x1xf32>
    %c0_33 = arith.constant 0 : index
    %c0_34 = arith.constant 0 : index
    %c0_35 = arith.constant 0 : index
    %71 = vector.load %arg7[%c0_33, %c0_34, %c0_35] : memref<1x4x1xf32, #tpu.memory_space<vmem>>, vector<1x4x1xf32>
    %72 = vector.shape_cast %71 : vector<1x4x1xf32> to vector<4x1xf32>
    %73 = vector.shape_cast %70 : vector<4x1xf32> to vector<1x4x1xf32>
    tpu.vector_store %arg7[%c0_33, %c0_34, %c0_35], %73 {strides = array<i32>} : memref<1x4x1xf32, #tpu.memory_space<vmem>>, vector<1x4x1xf32>,
    return
  }
  func.func @transform_0(%arg0: i32) -> (i32, i32, i32) {
    %c0_i32 = arith.constant 0 : i32
    %c0_i32_0 = arith.constant 0 : i32
    %c0_i32_1 = arith.constant 0 : i32
    return %arg0, %c0_i32, %c0_i32_0 : i32, i32, i32
  }
  func.func @transform_1(%arg0: i32) -> (i32, i32, i32) {
    %c0_i32 = arith.constant 0 : i32
    %c0_i32_0 = arith.constant 0 : i32
    %c0_i32_1 = arith.constant 0 : i32
    return %arg0, %c0_i32, %c0_i32_0 : i32, i32, i32
  }
  func.func @transform_2(%arg0: i32) -> (i32, i32, i32) {
    %c0_i32 = arith.constant 0 : i32
    %c0_i32_0 = arith.constant 0 : i32
    %c0_i32_1 = arith.constant 0 : i32
    %c0_i32_2 = arith.constant 0 : i32
    return %c0_i32, %c0_i32_0, %c0_i32_1 : i32, i32, i32
  }
  func.func @transform_3(%arg0: i32) -> (i32, i32, i32) {
    %c0_i32 = arith.constant 0 : i32
    %c0_i32_0 = arith.constant 0 : i32
    %c0_i32_1 = arith.constant 0 : i32
    %c0_i32_2 = arith.constant 0 : i32
    return %c0_i32, %c0_i32_0, %c0_i32_1 : i32, i32, i32
  }
  func.func @transform_4(%arg0: i32) -> (i32, i32) {
    %c0_i32 = arith.constant 0 : i32
    %c0_i32_0 = arith.constant 0 : i32
    %c0_i32_1 = arith.constant 0 : i32
    return %c0_i32, %c0_i32_0 : i32, i32
  }
  func.func @transform_5(%arg0: i32) -> (i32, i32) {
    %c0_i32 = arith.constant 0 : i32
    %c0_i32_0 = arith.constant 0 : i32
    %c0_i32_1 = arith.constant 0 : i32
    return %c0_i32, %c0_i32_0 : i32, i32
  }
  func.func @transform_6(%arg0: i32) -> (i32, i32, i32) {
    %c0_i32 = arith.constant 0 : i32
    %c0_i32_0 = arith.constant 0 : i32
    %c0_i32_1 = arith.constant 0 : i32
    return %arg0, %c0_i32, %c0_i32_0 : i32, i32, i32
  }
}

</mosaic_0001>

<llo_original>
// kernel: attention_model_forward.1
$region0: #{attention_model_forward.1}
  #allocation0 [shape = 'u32[]', space=smem, size = 0x4, offset = 0x4, fixed_abs, tag = 'smem constant byte address 0x4 - core index']
  #allocation1 [shape = 'u32[144,128]{1,0:T(1,128)}', space=vmem, size = 0x12000, scoped, tag = 'internal scratch']
  %s0 = inlined_call_operand.vmem [shape: f32[4,1,19], index: 0, kind: input, shape index: {}]
  %s1 = inlined_call_operand.vmem [shape: f32[4,19,1], index: 1, kind: input, shape index: {}]
  %s2 = inlined_call_operand.hbm [shape: f32[4,63,19], index: 2, kind: input, shape index: {}]
  %s3 = inlined_call_operand.hbm [shape: f32[2,19,63], index: 3, kind: input, shape index: {}]
  %s4 = inlined_call_operand.vmem [shape: f32[63,63], index: 4, kind: input, shape index: {}]
  %s5 = inlined_call_operand.vmem [shape: f32[3,63], index: 5, kind: input, shape index: {}]
  %s6 = inlined_call_operand.vmem [shape: f32[1,4,1], index: 6, kind: output, shape index: {}]
  %s7 = sld [smem:[#allocation0]]
  $region42: #{attention_model_forward.1} parent=0
    _
  %s9 = ssub.s32 1, %s7
  %s10 = scalar_select 0, %s9, %s7
  $region1: #{attention_model_forward.1} parent=0
    #allocation2 [shape = 'u8[131072]{0}', space=vmem, size = 0x20000, scoped, tag = 'input window, operand 2, single buffered']
    #allocation3 [shape = 's32[1]{0}', space=sflag, size = 0x4, scoped, tag = 'scoped memory for attention_model_forward.1']
    #allocation4 [shape = 'u8[24576]{0}', space=vmem, size = 0x6000, scoped, tag = 'input window, operand 3, single buffered']
    #allocation5 [shape = 's32[1]{0}', space=sflag, size = 0x4, scoped, tag = 'scoped memory for attention_model_forward.1']
    %11 = vsyncpa [#allocation3], 0
    %12 = vsyncpa [#allocation5], 0
    // Predicated region
    $region2: #{attention_model_forward.1} parent=1 // pred_check
      _
    $region3: #{attention_model_forward.1} parent=1 // pred_check_branch
      %14 = sbr.rel (0) target = $region5
    $region4: #{attention_model_forward.1} parent=1 // pred_region
      _
    $region5: #{attention_model_forward.1} parent=1 // pred_fallthru
      _
    // Predicated region
    $region6: #{attention_model_forward.1} parent=1 // pred_check
      _
    $region7: #{attention_model_forward.1} parent=1 // pred_check_branch
      %16 = sbr.rel (0) target = $region9
    $region8: #{attention_model_forward.1} parent=1 // pred_region
      _
    $region9: #{attention_model_forward.1} parent=1 // pred_fallthru
      _
    // Predicated region
    $region10: #{attention_model_forward.1} parent=1 // pred_check
      _
    $region11: #{attention_model_forward.1} parent=1 // pred_check_branch
      %18 = sbr.rel (0) target = $region13
    $region12: #{attention_model_forward.1} parent=1 // pred_region
      %s20 = ssub.s32 4096, 4096
      %21 = vsyncadd [#allocation3], %s20
      %s22 = sshll.u32 [#allocation2], 4
      %s23 = int_to_ptr.vmem [resolvable:$true] %s22
      %28 = dma.hbm_to_vmem [thread:$0]  %s2, 4096, %s23, [#allocation3], 128, 128, 8
    $region13: #{attention_model_forward.1} parent=1 // pred_fallthru
      _
    // Predicated region
    $region14: #{attention_model_forward.1} parent=1 // pred_check
      _
    $region15: #{attention_model_forward.1} parent=1 // pred_check_branch
      %30 = sbr.rel (0) target = $region17
    $region16: #{attention_model_forward.1} parent=1 // pred_region
      %s32 = ssub.s32 768, 768
      %33 = vsyncadd [#allocation5], %s32
      %s34 = sshll.u32 [#allocation4], 4
      %s35 = int_to_ptr.vmem [resolvable:$true] %s34
      %40 = dma.hbm_to_vmem [thread:$0]  %s3, 768, %s35, [#allocation5], 128, 128, 8
    $region17: #{attention_model_forward.1} parent=1 // pred_fallthru
      _
    // Predicated region
    $region18: #{attention_model_forward.1} parent=1 // pred_check
      _
    $region19: #{attention_model_forward.1} parent=1 // pred_check_branch
      %42 = sbr.rel (0) target = $region21
    $region20: #{attention_model_forward.1} parent=1 // pred_region
      _
    $region21: #{attention_model_forward.1} parent=1 // pred_fallthru
      _
    // Predicated region
    $region22: #{attention_model_forward.1} parent=1 // pred_check
      _
    $region23: #{attention_model_forward.1} parent=1 // pred_check_branch
      %44 = sbr.rel (0) target = $region25
    $region24: #{attention_model_forward.1} parent=1 // pred_region
      _
    $region25: #{attention_model_forward.1} parent=1 // pred_fallthru
      _
    // Predicated region
    $region26: #{attention_model_forward.1} parent=1 // pred_check
      _
    $region27: #{attention_model_forward.1} parent=1 // pred_check_branch
      %46 = sbr.rel (0) target = $region29
    $region28: #{attention_model_forward.1} parent=1 // pred_region
      %47 = dma.done [#allocation3], 4096
    $region29: #{attention_model_forward.1} parent=1 // pred_fallthru
      _
    // Predicated region
    $region30: #{attention_model_forward.1} parent=1 // pred_check
      _
    $region31: #{attention_model_forward.1} parent=1 // pred_check_branch
      %49 = sbr.rel (0) target = $region33
    $region32: #{attention_model_forward.1} parent=1 // pred_region
      %50 = dma.done [#allocation5], 768
    $region33: #{attention_model_forward.1} parent=1 // pred_fallthru
      _
    %v51 = vld [vmem:[%s0] sm:$0x1]
    %v52 = vld [vmem:[%s0 + $0x1] sm:$0x1]
    %v53 = vld [vmem:[%s0 + $0x2] sm:$0x1]
    %v54 = vld [vmem:[%s0 + $0x3] sm:$0x1]
    %v55 = vld [vmem:[%s1] sm:$0xff]
    %v56 = vld [vmem:[%s1 + $0x8] sm:$0xff]
    %v57 = vld [vmem:[%s1 + $0x10] sm:$0x7]
    %v58 = vld [vmem:[%s1 + $0x18] sm:$0xff]
    %v59 = vld [vmem:[%s1 + $0x20] sm:$0xff]
    %v60 = vld [vmem:[%s1 + $0x28] sm:$0x7]
    %v61 = vld [vmem:[%s1 + $0x30] sm:$0xff]
    %v62 = vld [vmem:[%s1 + $0x38] sm:$0xff]
    %v63 = vld [vmem:[%s1 + $0x40] sm:$0x7]
    %v64 = vld [vmem:[%s1 + $0x48] sm:$0xff]
    %v65 = vld [vmem:[%s1 + $0x50] sm:$0xff]
    %v66 = vld [vmem:[%s1 + $0x58] sm:$0x7]
    %v67 = vld [vmem:[%s5] sm:$0x7]
    %v68 = vld [vmem:[#allocation2] sm:$0xff]
    %v69 = vld [vmem:[#allocation2 + $0x8] sm:$0xff]
    %v70 = vld [vmem:[#allocation2 + $0x10] sm:$0xff]
    %v71 = vld [vmem:[#allocation2 + $0x18] sm:$0xff]
    %v72 = vld [vmem:[#allocation2 + $0x20] sm:$0xff]
    %v73 = vld [vmem:[#allocation2 + $0x28] sm:$0xff]
    %v74 = vld [vmem:[#allocation2 + $0x30] sm:$0xff]
    %v75 = vld [vmem:[#allocation2 + $0x38] sm:$0x7f]
    %v80 = vlaneseq
    %v81 = vshrl.u32 %v80, 7
    %v82 = vsub.s32 0, %v81
    %v83 = vrot.slane %v51, %v82
    %v84 = vlaneseq
    %v85 = vshrl.u32 %v84, 7
    %v86 = vsub.s32 0, %v85
    %v87 = vrot.slane %v52, %v86
    %v88 = vlaneseq
    %v89 = vshrl.u32 %v88, 7
    %v90 = vsub.s32 0, %v89
    %v91 = vrot.slane %v53, %v90
    %v92 = vlaneseq
    %v93 = vshrl.u32 %v92, 7
    %v94 = vsub.s32 0, %v93
    %v95 = vrot.slane %v54, %v94
    %v100 = vmul.f32 %v83, %v68
    %v101 = vmul.f32 %v83, %v69
    %v102 = vmul.f32 %v83, %v70
    %v103 = vmul.f32 %v83, %v71
    %v104 = vmul.f32 %v83, %v72
    %v105 = vmul.f32 %v83, %v73
    %v106 = vmul.f32 %v83, %v74
    %v107 = vmul.f32 %v83, %v75
    %v108 = vmul.f32 %v87, %v68
    %v109 = vmul.f32 %v87, %v69
    %v110 = vmul.f32 %v87, %v70
    %v111 = vmul.f32 %v87, %v71
    %v112 = vmul.f32 %v87, %v72
    %v113 = vmul.f32 %v87, %v73
    %v114 = vmul.f32 %v87, %v74
    %v115 = vmul.f32 %v87, %v75
    %v116 = vmul.f32 %v91, %v68
    %v117 = vmul.f32 %v91, %v69
    %v118 = vmul.f32 %v91, %v70
    %v119 = vmul.f32 %v91, %v71
    %v120 = vmul.f32 %v91, %v72
    %v121 = vmul.f32 %v91, %v73
    %v122 = vmul.f32 %v91, %v74
    %v123 = vmul.f32 %v91, %v75
    %v124 = vmul.f32 %v95, %v68
    %v125 = vmul.f32 %v95, %v69
    %v126 = vmul.f32 %v95, %v70
    %v127 = vmul.f32 %v95, %v71
    %v128 = vmul.f32 %v95, %v72
    %v129 = vmul.f32 %v95, %v73
    %v130 = vmul.f32 %v95, %v74
    %v131 = vmul.f32 %v95, %v75
    %s132 = scalar_lea.vmem [#allocation2], 64
    %v133 = vld [vmem:[%s132] sm:$0xff]
    %v134 = vld [vmem:[%s132 + $0x8] sm:$0xff]
    %v135 = vld [vmem:[%s132 + $0x10] sm:$0xff]
    %v136 = vld [vmem:[%s132 + $0x18] sm:$0xff]
    %v137 = vld [vmem:[%s132 + $0x20] sm:$0xff]
    %v138 = vld [vmem:[%s132 + $0x28] sm:$0xff]
    %v139 = vld [vmem:[%s132 + $0x30] sm:$0xff]
    %v140 = vld [vmem:[%s132 + $0x38] sm:$0x7f]
    %v141 = vadd.f32 %v100, %v133
    %v142 = vadd.f32 %v101, %v134
    %v143 = vadd.f32 %v102, %v135
    %v144 = vadd.f32 %v103, %v136
    %v145 = vadd.f32 %v104, %v137
    %v146 = vadd.f32 %v105, %v138
    %v147 = vadd.f32 %v106, %v139
    %v148 = vadd.f32 %v107, %v140
    %v149 = vadd.f32 %v108, %v133
    %v150 = vadd.f32 %v109, %v134
    %v151 = vadd.f32 %v110, %v135
    %v152 = vadd.f32 %v111, %v136
    %v153 = vadd.f32 %v112, %v137
    %v154 = vadd.f32 %v113, %v138
    %v155 = vadd.f32 %v114, %v139
    %v156 = vadd.f32 %v115, %v140
    %v157 = vadd.f32 %v116, %v133
    %v158 = vadd.f32 %v117, %v134
    %v159 = vadd.f32 %v118, %v135
    %v160 = vadd.f32 %v119, %v136
    %v161 = vadd.f32 %v120, %v137
    %v162 = vadd.f32 %v121, %v138
    %v163 = vadd.f32 %v122, %v139
    %v164 = vadd.f32 %v123, %v140
    %v165 = vadd.f32 %v124, %v133
    %v166 = vadd.f32 %v125, %v134
    %v167 = vadd.f32 %v126, %v135
    %v168 = vadd.f32 %v127, %v136
    %v169 = vadd.f32 %v128, %v137
    %v170 = vadd.f32 %v129, %v138
    %v171 = vadd.f32 %v130, %v139
    %v172 = vadd.f32 %v131, %v140
    %v173 = vld [vmem:[#allocation4] sm:$0xff]
    %v174 = vld [vmem:[#allocation4 + $0x8] sm:$0xff]
    %v175 = vld [vmem:[#allocation4 + $0x10] sm:$0x7]
    %177 = vset.pattern.permute.xlu0 0
    %178 = vperm.xlu0 %177, %v55
    %v179 = vpop.permute.xlu0 %178
    %182 = vset.pattern.permute.xlu0 0
    %183 = vperm.xlu0 %182, %v56
    %v184 = vpop.permute.xlu0 %183
    %187 = vset.pattern.permute.xlu0 0
    %188 = vperm.xlu0 %187, %v57
    %v189 = vpop.permute.xlu0 %188
    %192 = vset.pattern.permute.xlu0 0
    %193 = vperm.xlu0 %192, %v58
    %v194 = vpop.permute.xlu0 %193
    %197 = vset.pattern.permute.xlu0 0
    %198 = vperm.xlu0 %197, %v59
    %v199 = vpop.permute.xlu0 %198
    %202 = vset.pattern.permute.xlu0 0
    %203 = vperm.xlu0 %202, %v60
    %v204 = vpop.permute.xlu0 %203
    %207 = vset.pattern.permute.xlu0 0
    %208 = vperm.xlu0 %207, %v61
    %v209 = vpop.permute.xlu0 %208
    %212 = vset.pattern.permute.xlu0 0
    %213 = vperm.xlu0 %212, %v62
    %v214 = vpop.permute.xlu0 %213
    %217 = vset.pattern.permute.xlu0 0
    %218 = vperm.xlu0 %217, %v63
    %v219 = vpop.permute.xlu0 %218
    %222 = vset.pattern.permute.xlu0 0
    %223 = vperm.xlu0 %222, %v64
    %v224 = vpop.permute.xlu0 %223
    %227 = vset.pattern.permute.xlu0 0
    %228 = vperm.xlu0 %227, %v65
    %v229 = vpop.permute.xlu0 %228
    %232 = vset.pattern.permute.xlu0 0
    %233 = vperm.xlu0 %232, %v66
    %v234 = vpop.permute.xlu0 %233
    %v236 = vmul.f32 %v179, %v173
    %v237 = vmul.f32 %v184, %v174
    %v238 = vmul.f32 %v189, %v175
    %v239 = vmul.f32 %v194, %v173
    %v240 = vmul.f32 %v199, %v174
    %v241 = vmul.f32 %v204, %v175
    %v242 = vmul.f32 %v209, %v173
    %v243 = vmul.f32 %v214, %v174
    %v244 = vmul.f32 %v219, %v175
    %v245 = vmul.f32 %v224, %v173
    %v246 = vmul.f32 %v229, %v174
    %v247 = vmul.f32 %v234, %v175
    %s248 = scalar_lea.vmem [#allocation4], 24
    %v249 = vld [vmem:[%s248] sm:$0xff]
    %v250 = vld [vmem:[%s248 + $0x8] sm:$0xff]
    %v251 = vld [vmem:[%s248 + $0x10] sm:$0x7]
    %v252 = vadd.f32 %v236, %v249
    %v253 = vadd.f32 %v237, %v250
    %v254 = vadd.f32 %v238, %v251
    %v255 = vadd.f32 %v239, %v249
    %v256 = vadd.f32 %v240, %v250
    %v257 = vadd.f32 %v241, %v251
    %v258 = vadd.f32 %v242, %v249
    %v259 = vadd.f32 %v243, %v250
    %v260 = vadd.f32 %v244, %v251
    %v261 = vadd.f32 %v245, %v249
    %v262 = vadd.f32 %v246, %v250
    %v263 = vadd.f32 %v247, %v251
    %vm264 = vcmask 154624
    %v266 = vsel %vm264, %v141, 0
    %v269 = vsel %vm264, %v142, 0
    %v272 = vsel %vm264, %v143, 0
    %v275 = vsel %vm264, %v144, 0
    %v278 = vsel %vm264, %v145, 0
    %v281 = vsel %vm264, %v146, 0
    %v284 = vsel %vm264, %v147, 0
    %v287 = vsel %vm264, %v148, 0
    %vm289 = vcmask 1042432
    %v291 = vsel %vm289, %v254, 0
    %293 = vmatprep.subr.mxu0 0.0
    %294 = vmatpush1.msra.mxu0 0.0
    %295 = vmatprep.subr.mxu0 0.0
    %296 = vmatpush1.msra.mxu0 0.0
    %297 = vmatprep.subr.mxu0 0.0
    %298 = vmatpush1.msra.mxu0 0.0
    %299 = vmatprep.subr.mxu0 0.0
    %300 = vmatpush1.msra.mxu0 0.0
    %301 = vmatprep.subr.mxu0 0.0
    %302 = vmatpush1.msra.mxu0 0.0
    %303 = vmatprep.subr.mxu0 0.0
    %304 = vmatpush1.msra.mxu0 0.0
    %305 = vmatprep.subr.mxu0 0.0
    %306 = vmatpush1.msra.mxu0 0.0
    %307 = vmatprep.subr.mxu0 0.0
    %308 = vmatpush1.msra.mxu0 0.0
    %309 = vmatprep.subr.mxu0 0.0
    %310 = vmatpush1.msra.mxu0 0.0
    %311 = vmatprep.subr.mxu0 0.0
    %312 = vmatpush1.msra.mxu0 0.0
    %313 = vmatprep.subr.mxu0 0.0
    %314 = vmatpush1.msra.mxu0 0.0
    %315 = vmatprep.subr.mxu0 0.0
    %316 = vmatpush1.msra.mxu0 0.0
    %317 = vmatprep.subr.mxu0 0.0
    %318 = vmatpush1.msra.mxu0 0.0
    %319 = vmatprep.subr.mxu0 0.0
    %320 = vmatpush1.msra.mxu0 %v291
    %321 = vmatprep.subr.mxu0 0.0
    %322 = vmatpush1.msra.mxu0 %v253
    %323 = vmatprep.subr.mxu0 0.0
    %324 = vmatpush1.msra.mxu0 %v252
    %325 = vmatprep.subr.mxu0 0.0
    %326 = vmatpush2.msra.mxu0 0.0
    %327 = vmatprep.subr.mxu0 0.0
    %328 = vmatpush2.msra.mxu0 0.0
    %329 = vmatprep.subr.mxu0 0.0
    %330 = vmatpush2.msra.mxu0 0.0
    %331 = vmatprep.subr.mxu0 0.0
    %332 = vmatpush2.msra.mxu0 0.0
    %333 = vmatprep.subr.mxu0 0.0
    %334 = vmatpush2.msra.mxu0 0.0
    %335 = vmatprep.subr.mxu0 0.0
    %336 = vmatpush2.msra.mxu0 0.0
    %337 = vmatprep.subr.mxu0 0.0
    %338 = vmatpush2.msra.mxu0 0.0
    %339 = vmatprep.subr.mxu0 0.0
    %340 = vmatpush2.msra.mxu0 0.0
    %341 = vmatprep.subr.mxu0 0.0
    %342 = vmatpush2.msra.mxu0 0.0
    %343 = vmatprep.subr.mxu0 0.0
    %344 = vmatpush2.msra.mxu0 0.0
    %345 = vmatprep.subr.mxu0 0.0
    %346 = vmatpush2.msra.mxu0 0.0
    %347 = vmatprep.subr.mxu0 0.0
    %348 = vmatpush2.msra.mxu0 0.0
    %349 = vmatprep.subr.mxu0 0.0
    %350 = vmatpush2.msra.mxu0 0.0
    %351 = vmatprep.subr.mxu0 0.0
    %352 = vmatpush2.msra.mxu0 0.0
    %353 = vmatprep.subr.mxu0 0.0
    %354 = vmatpush2.msra.mxu0 0.0
    %355 = vmatprep.subr.mxu0 0.0
    %356 = vmatpush2.msra.mxu0 0.0
    %357 = vmatprep.mubr.f32.mxu0 0.0
    %358 = vmatmul.mubr.f32.gmra.mxu0 %v266
    %v359 = vpop.f32.mrf.mxu0
    %v360 = vadd.f32 0.0, %v359
    %v361 = vpop.f32.mrf.mxu0
    %362 = vmatprep.mubr.f32.mxu0 0.0
    %363 = vmatmul.mubr.f32.gmra.mxu0 %v269
    %v364 = vpop.f32.mrf.mxu0
    %v365 = vadd.f32 0.0, %v364
    %v366 = vpop.f32.mrf.mxu0
    %367 = vmatprep.mubr.f32.mxu0 0.0
    %368 = vmatmul.mubr.f32.gmra.mxu0 %v272
    %v369 = vpop.f32.mrf.mxu0
    %v370 = vadd.f32 0.0, %v369
    %v371 = vpop.f32.mrf.mxu0
    %372 = vmatprep.mubr.f32.mxu0 0.0
    %373 = vmatmul.mubr.f32.gmra.mxu0 %v275
    %v374 = vpop.f32.mrf.mxu0
    %v375 = vadd.f32 0.0, %v374
    %v376 = vpop.f32.mrf.mxu0
    %377 = vmatprep.mubr.f32.mxu0 0.0
    %378 = vmatmul.mubr.f32.gmra.mxu0 %v278
    %v379 = vpop.f32.mrf.mxu0
    %v380 = vadd.f32 0.0, %v379
    %v381 = vpop.f32.mrf.mxu0
    %382 = vmatprep.mubr.f32.mxu0 0.0
    %383 = vmatmul.mubr.f32.gmra.mxu0 %v281
    %v384 = vpop.f32.mrf.mxu0
    %v385 = vadd.f32 0.0, %v384
    %v386 = vpop.f32.mrf.mxu0
    %387 = vmatprep.mubr.f32.mxu0 0.0
    %388 = vmatmul.mubr.f32.gmra.mxu0 %v284
    %v389 = vpop.f32.mrf.mxu0
    %v390 = vadd.f32 0.0, %v389
    %v391 = vpop.f32.mrf.mxu0
    %392 = vmatprep.mubr.f32.mxu0 0.0
    %393 = vmatmul.mubr.f32.gmra.mxu0 %v287
    %v394 = vpop.f32.mrf.mxu0
    %v395 = vadd.f32 0.0, %v394
    %v396 = vpop.f32.mrf.mxu0
    %397 = vdwg.mxu0
    %v399 = vsel %vm264, %v149, 0
    %v402 = vsel %vm264, %v150, 0
    %v405 = vsel %vm264, %v151, 0
    %v408 = vsel %vm264, %v152, 0
    %v411 = vsel %vm264, %v153, 0
    %v414 = vsel %vm264, %v154, 0
    %v417 = vsel %vm264, %v155, 0
    %v420 = vsel %vm264, %v156, 0
    %v423 = vsel %vm289, %v257, 0
    %425 = vmatprep.subr.mxu0 0.0
    %426 = vmatpush1.msra.mxu0 0.0
    %427 = vmatprep.subr.mxu0 0.0
    %428 = vmatpush1.msra.mxu0 0.0
    %429 = vmatprep.subr.mxu0 0.0
    %430 = vmatpush1.msra.mxu0 0.0
    %431 = vmatprep.subr.mxu0 0.0
    %432 = vmatpush1.msra.mxu0 0.0
    %433 = vmatprep.subr.mxu0 0.0
    %434 = vmatpush1.msra.mxu0 0.0
    %435 = vmatprep.subr.mxu0 0.0
    %436 = vmatpush1.msra.mxu0 0.0
    %437 = vmatprep.subr.mxu0 0.0
    %438 = vmatpush1.msra.mxu0 0.0
    %439 = vmatprep.subr.mxu0 0.0
    %440 = vmatpush1.msra.mxu0 0.0
    %441 = vmatprep.subr.mxu0 0.0
    %442 = vmatpush1.msra.mxu0 0.0
    %443 = vmatprep.subr.mxu0 0.0
    %444 = vmatpush1.msra.mxu0 0.0
    %445 = vmatprep.subr.mxu0 0.0
    %446 = vmatpush1.msra.mxu0 0.0
    %447 = vmatprep.subr.mxu0 0.0
    %448 = vmatpush1.msra.mxu0 0.0
    %449 = vmatprep.subr.mxu0 0.0
    %450 = vmatpush1.msra.mxu0 0.0
    %451 = vmatprep.subr.mxu0 0.0
    %452 = vmatpush1.msra.mxu0 %v423
    %453 = vmatprep.subr.mxu0 0.0
    %454 = vmatpush1.msra.mxu0 %v256
    %455 = vmatprep.subr.mxu0 0.0
    %456 = vmatpush1.msra.mxu0 %v255
    %457 = vmatprep.subr.mxu0 0.0
    %458 = vmatpush2.msra.mxu0 0.0
    %459 = vmatprep.subr.mxu0 0.0
    %460 = vmatpush2.msra.mxu0 0.0
    %461 = vmatprep.subr.mxu0 0.0
    %462 = vmatpush2.msra.mxu0 0.0
    %463 = vmatprep.subr.mxu0 0.0
    %464 = vmatpush2.msra.mxu0 0.0
    %465 = vmatprep.subr.mxu0 0.0
    %466 = vmatpush2.msra.mxu0 0.0
    %467 = vmatprep.subr.mxu0 0.0
    %468 = vmatpush2.msra.mxu0 0.0
    %469 = vmatprep.subr.mxu0 0.0
    %470 = vmatpush2.msra.mxu0 0.0
    %471 = vmatprep.subr.mxu0 0.0
    %472 = vmatpush2.msra.mxu0 0.0
    %473 = vmatprep.subr.mxu0 0.0
    %474 = vmatpush2.msra.mxu0 0.0
    %475 = vmatprep.subr.mxu0 0.0
    %476 = vmatpush2.msra.mxu0 0.0
    %477 = vmatprep.subr.mxu0 0.0
    %478 = vmatpush2.msra.mxu0 0.0
    %479 = vmatprep.subr.mxu0 0.0
    %480 = vmatpush2.msra.mxu0 0.0
    %481 = vmatprep.subr.mxu0 0.0
    %482 = vmatpush2.msra.mxu0 0.0
    %483 = vmatprep.subr.mxu0 0.0
    %484 = vmatpush2.msra.mxu0 0.0
    %485 = vmatprep.subr.mxu0 0.0
    %486 = vmatpush2.msra.mxu0 0.0
    %487 = vmatprep.subr.mxu0 0.0
    %488 = vmatpush2.msra.mxu0 0.0
    %489 = vmatprep.mubr.f32.mxu0 0.0
    %490 = vmatmul.mubr.f32.gmra.mxu0 %v399
    %v491 = vpop.f32.mrf.mxu0
    %v492 = vadd.f32 0.0, %v491
    %v493 = vpop.f32.mrf.mxu0
    %494 = vmatprep.mubr.f32.mxu0 0.0
    %495 = vmatmul.mubr.f32.gmra.mxu0 %v402
    %v496 = vpop.f32.mrf.mxu0
    %v497 = vadd.f32 0.0, %v496
    %v498 = vpop.f32.mrf.mxu0
    %499 = vmatprep.mubr.f32.mxu0 0.0
    %500 = vmatmul.mubr.f32.gmra.mxu0 %v405
    %v501 = vpop.f32.mrf.mxu0
    %v502 = vadd.f32 0.0, %v501
    %v503 = vpop.f32.mrf.mxu0
    %504 = vmatprep.mubr.f32.mxu0 0.0
    %505 = vmatmul.mubr.f32.gmra.mxu0 %v408
    %v506 = vpop.f32.mrf.mxu0
    %v507 = vadd.f32 0.0, %v506
    %v508 = vpop.f32.mrf.mxu0
    %509 = vmatprep.mubr.f32.mxu0 0.0
    %510 = vmatmul.mubr.f32.gmra.mxu0 %v411
    %v511 = vpop.f32.mrf.mxu0
    %v512 = vadd.f32 0.0, %v511
    %v513 = vpop.f32.mrf.mxu0
    %514 = vmatprep.mubr.f32.mxu0 0.0
    %515 = vmatmul.mubr.f32.gmra.mxu0 %v414
    %v516 = vpop.f32.mrf.mxu0
    %v517 = vadd.f32 0.0, %v516
    %v518 = vpop.f32.mrf.mxu0
    %519 = vmatprep.mubr.f32.mxu0 0.0
    %520 = vmatmul.mubr.f32.gmra.mxu0 %v417
    %v521 = vpop.f32.mrf.mxu0
    %v522 = vadd.f32 0.0, %v521
    %v523 = vpop.f32.mrf.mxu0
    %524 = vmatprep.mubr.f32.mxu0 0.0
    %525 = vmatmul.mubr.f32.gmra.mxu0 %v420
    %v526 = vpop.f32.mrf.mxu0
    %v527 = vadd.f32 0.0, %v526
    %v528 = vpop.f32.mrf.mxu0
    %529 = vdwg.mxu0
    %v531 = vsel %vm264, %v157, 0
    %v534 = vsel %vm264, %v158, 0
    %v537 = vsel %vm264, %v159, 0
    %v540 = vsel %vm264, %v160, 0
    %v543 = vsel %vm264, %v161, 0
    %v546 = vsel %vm264, %v162, 0
    %v549 = vsel %vm264, %v163, 0
    %v552 = vsel %vm264, %v164, 0
    %v555 = vsel %vm289, %v260, 0
    %557 = vmatprep.subr.mxu0 0.0
    %558 = vmatpush1.msra.mxu0 0.0
    %559 = vmatprep.subr.mxu0 0.0
    %560 = vmatpush1.msra.mxu0 0.0
    %561 = vmatprep.subr.mxu0 0.0
    %562 = vmatpush1.msra.mxu0 0.0
    %563 = vmatprep.subr.mxu0 0.0
    %564 = vmatpush1.msra.mxu0 0.0
    %565 = vmatprep.subr.mxu0 0.0
    %566 = vmatpush1.msra.mxu0 0.0
    %567 = vmatprep.subr.mxu0 0.0
    %568 = vmatpush1.msra.mxu0 0.0
    %569 = vmatprep.subr.mxu0 0.0
    %570 = vmatpush1.msra.mxu0 0.0
    %571 = vmatprep.subr.mxu0 0.0
    %572 = vmatpush1.msra.mxu0 0.0
    %573 = vmatprep.subr.mxu0 0.0
    %574 = vmatpush1.msra.mxu0 0.0
    %575 = vmatprep.subr.mxu0 0.0
    %576 = vmatpush1.msra.mxu0 0.0
    %577 = vmatprep.subr.mxu0 0.0
    %578 = vmatpush1.msra.mxu0 0.0
    %579 = vmatprep.subr.mxu0 0.0
    %580 = vmatpush1.msra.mxu0 0.0
    %581 = vmatprep.subr.mxu0 0.0
    %582 = vmatpush1.msra.mxu0 0.0
    %583 = vmatprep.subr.mxu0 0.0
    %584 = vmatpush1.msra.mxu0 %v555
    %585 = vmatprep.subr.mxu0 0.0
    %586 = vmatpush1.msra.mxu0 %v259
    %587 = vmatprep.subr.mxu0 0.0
    %588 = vmatpush1.msra.mxu0 %v258
    %589 = vmatprep.subr.mxu0 0.0
    %590 = vmatpush2.msra.mxu0 0.0
    %591 = vmatprep.subr.mxu0 0.0
    %592 = vmatpush2.msra.mxu0 0.0
    %593 = vmatprep.subr.mxu0 0.0
    %594 = vmatpush2.msra.mxu0 0.0
    %595 = vmatprep.subr.mxu0 0.0
    %596 = vmatpush2.msra.mxu0 0.0
    %597 = vmatprep.subr.mxu0 0.0
    %598 = vmatpush2.msra.mxu0 0.0
    %599 = vmatprep.subr.mxu0 0.0
    %600 = vmatpush2.msra.mxu0 0.0
    %601 = vmatprep.subr.mxu0 0.0
    %602 = vmatpush2.msra.mxu0 0.0
    %603 = vmatprep.subr.mxu0 0.0
    %604 = vmatpush2.msra.mxu0 0.0
    %605 = vmatprep.subr.mxu0 0.0
    %606 = vmatpush2.msra.mxu0 0.0
    %607 = vmatprep.subr.mxu0 0.0
    %608 = vmatpush2.msra.mxu0 0.0
    %609 = vmatprep.subr.mxu0 0.0
    %610 = vmatpush2.msra.mxu0 0.0
    %611 = vmatprep.subr.mxu0 0.0
    %612 = vmatpush2.msra.mxu0 0.0
    %613 = vmatprep.subr.mxu0 0.0
    %614 = vmatpush2.msra.mxu0 0.0
    %615 = vmatprep.subr.mxu0 0.0
    %616 = vmatpush2.msra.mxu0 0.0
    %617 = vmatprep.subr.mxu0 0.0
    %618 = vmatpush2.msra.mxu0 0.0
    %619 = vmatprep.subr.mxu0 0.0
    %620 = vmatpush2.msra.mxu0 0.0
    %621 = vmatprep.mubr.f32.mxu0 0.0
    %622 = vmatmul.mubr.f32.gmra.mxu0 %v531
    %v623 = vpop.f32.mrf.mxu0
    %v624 = vadd.f32 0.0, %v623
    %v625 = vpop.f32.mrf.mxu0
    %626 = vmatprep.mubr.f32.mxu0 0.0
    %627 = vmatmul.mubr.f32.gmra.mxu0 %v534
    %v628 = vpop.f32.mrf.mxu0
    %v629 = vadd.f32 0.0, %v628
    %v630 = vpop.f32.mrf.mxu0
    %631 = vmatprep.mubr.f32.mxu0 0.0
    %632 = vmatmul.mubr.f32.gmra.mxu0 %v537
    %v633 = vpop.f32.mrf.mxu0
    %v634 = vadd.f32 0.0, %v633
    %v635 = vpop.f32.mrf.mxu0
    %636 = vmatprep.mubr.f32.mxu0 0.0
    %637 = vmatmul.mubr.f32.gmra.mxu0 %v540
    %v638 = vpop.f32.mrf.mxu0
    %v639 = vadd.f32 0.0, %v638
    %v640 = vpop.f32.mrf.mxu0
    %641 = vmatprep.mubr.f32.mxu0 0.0
    %642 = vmatmul.mubr.f32.gmra.mxu0 %v543
    %v643 = vpop.f32.mrf.mxu0
    %v644 = vadd.f32 0.0, %v643
    %v645 = vpop.f32.mrf.mxu0
    %646 = vmatprep.mubr.f32.mxu0 0.0
    %647 = vmatmul.mubr.f32.gmra.mxu0 %v546
    %v648 = vpop.f32.mrf.mxu0
    %v649 = vadd.f32 0.0, %v648
    %v650 = vpop.f32.mrf.mxu0
    %651 = vmatprep.mubr.f32.mxu0 0.0
    %652 = vmatmul.mubr.f32.gmra.mxu0 %v549
    %v653 = vpop.f32.mrf.mxu0
    %v654 = vadd.f32 0.0, %v653
    %v655 = vpop.f32.mrf.mxu0
    %656 = vmatprep.mubr.f32.mxu0 0.0
    %657 = vmatmul.mubr.f32.gmra.mxu0 %v552
    %v658 = vpop.f32.mrf.mxu0
    %v659 = vadd.f32 0.0, %v658
    %v660 = vpop.f32.mrf.mxu0
    %661 = vdwg.mxu0
    %v663 = vsel %vm264, %v165, 0
    %v666 = vsel %vm264, %v166, 0
    %v669 = vsel %vm264, %v167, 0
    %v672 = vsel %vm264, %v168, 0
    %v675 = vsel %vm264, %v169, 0
    %v678 = vsel %vm264, %v170, 0
    %v681 = vsel %vm264, %v171, 0
    %v684 = vsel %vm264, %v172, 0
    %v687 = vsel %vm289, %v263, 0
    %689 = vmatprep.subr.mxu0 0.0
    %690 = vmatpush1.msra.mxu0 0.0
    %691 = vmatprep.subr.mxu0 0.0
    %692 = vmatpush1.msra.mxu0 0.0
    %693 = vmatprep.subr.mxu0 0.0
    %694 = vmatpush1.msra.mxu0 0.0
    %695 = vmatprep.subr.mxu0 0.0
    %696 = vmatpush1.msra.mxu0 0.0
    %697 = vmatprep.subr.mxu0 0.0
    %698 = vmatpush1.msra.mxu0 0.0
    %699 = vmatprep.subr.mxu0 0.0
    %700 = vmatpush1.msra.mxu0 0.0
    %701 = vmatprep.subr.mxu0 0.0
    %702 = vmatpush1.msra.mxu0 0.0
    %703 = vmatprep.subr.mxu0 0.0
    %704 = vmatpush1.msra.mxu0 0.0
    %705 = vmatprep.subr.mxu0 0.0
    %706 = vmatpush1.msra.mxu0 0.0
    %707 = vmatprep.subr.mxu0 0.0
    %708 = vmatpush1.msra.mxu0 0.0
    %709 = vmatprep.subr.mxu0 0.0
    %710 = vmatpush1.msra.mxu0 0.0
    %711 = vmatprep.subr.mxu0 0.0
    %712 = vmatpush1.msra.mxu0 0.0
    %713 = vmatprep.subr.mxu0 0.0
    %714 = vmatpush1.msra.mxu0 0.0
    %715 = vmatprep.subr.mxu0 0.0
    %716 = vmatpush1.msra.mxu0 %v687
    %717 = vmatprep.subr.mxu0 0.0
    %718 = vmatpush1.msra.mxu0 %v262
    %719 = vmatprep.subr.mxu0 0.0
    %720 = vmatpush1.msra.mxu0 %v261
    %721 = vmatprep.subr.mxu0 0.0
    %722 = vmatpush2.msra.mxu0 0.0
    %723 = vmatprep.subr.mxu0 0.0
    %724 = vmatpush2.msra.mxu0 0.0
    %725 = vmatprep.subr.mxu0 0.0
    %726 = vmatpush2.msra.mxu0 0.0
    %727 = vmatprep.subr.mxu0 0.0
    %728 = vmatpush2.msra.mxu0 0.0
    %729 = vmatprep.subr.mxu0 0.0
    %730 = vmatpush2.msra.mxu0 0.0
    %731 = vmatprep.subr.mxu0 0.0
    %732 = vmatpush2.msra.mxu0 0.0
    %733 = vmatprep.subr.mxu0 0.0
    %734 = vmatpush2.msra.mxu0 0.0
    %735 = vmatprep.subr.mxu0 0.0
    %736 = vmatpush2.msra.mxu0 0.0
    %737 = vmatprep.subr.mxu0 0.0
    %738 = vmatpush2.msra.mxu0 0.0
    %739 = vmatprep.subr.mxu0 0.0
    %740 = vmatpush2.msra.mxu0 0.0
    %741 = vmatprep.subr.mxu0 0.0
    %742 = vmatpush2.msra.mxu0 0.0
    %743 = vmatprep.subr.mxu0 0.0
    %744 = vmatpush2.msra.mxu0 0.0
    %745 = vmatprep.subr.mxu0 0.0
    %746 = vmatpush2.msra.mxu0 0.0
    %747 = vmatprep.subr.mxu0 0.0
    %748 = vmatpush2.msra.mxu0 0.0
    %749 = vmatprep.subr.mxu0 0.0
    %750 = vmatpush2.msra.mxu0 0.0
    %751 = vmatprep.subr.mxu0 0.0
    %752 = vmatpush2.msra.mxu0 0.0
    %753 = vmatprep.mubr.f32.mxu0 0.0
    %754 = vmatmul.mubr.f32.gmra.mxu0 %v663
    %v755 = vpop.f32.mrf.mxu0
    %v756 = vadd.f32 0.0, %v755
    %v757 = vpop.f32.mrf.mxu0
    %758 = vmatprep.mubr.f32.mxu0 0.0
    %759 = vmatmul.mubr.f32.gmra.mxu0 %v666
    %v760 = vpop.f32.mrf.mxu0
    %v761 = vadd.f32 0.0, %v760
    %v762 = vpop.f32.mrf.mxu0
    %763 = vmatprep.mubr.f32.mxu0 0.0
    %764 = vmatmul.mubr.f32.gmra.mxu0 %v669
    %v765 = vpop.f32.mrf.mxu0
    %v766 = vadd.f32 0.0, %v765
    %v767 = vpop.f32.mrf.mxu0
    %768 = vmatprep.mubr.f32.mxu0 0.0
    %769 = vmatmul.mubr.f32.gmra.mxu0 %v672
    %v770 = vpop.f32.mrf.mxu0
    %v771 = vadd.f32 0.0, %v770
    %v772 = vpop.f32.mrf.mxu0
    %773 = vmatprep.mubr.f32.mxu0 0.0
    %774 = vmatmul.mubr.f32.gmra.mxu0 %v675
    %v775 = vpop.f32.mrf.mxu0
    %v776 = vadd.f32 0.0, %v775
    %v777 = vpop.f32.mrf.mxu0
    %778 = vmatprep.mubr.f32.mxu0 0.0
    %779 = vmatmul.mubr.f32.gmra.mxu0 %v678
    %v780 = vpop.f32.mrf.mxu0
    %v781 = vadd.f32 0.0, %v780
    %v782 = vpop.f32.mrf.mxu0
    %783 = vmatprep.mubr.f32.mxu0 0.0
    %784 = vmatmul.mubr.f32.gmra.mxu0 %v681
    %v785 = vpop.f32.mrf.mxu0
    %v786 = vadd.f32 0.0, %v785
    %v787 = vpop.f32.mrf.mxu0
    %788 = vmatprep.mubr.f32.mxu0 0.0
    %789 = vmatmul.mubr.f32.gmra.mxu0 %v684
    %v790 = vpop.f32.mrf.mxu0
    %v791 = vadd.f32 0.0, %v790
    %v792 = vpop.f32.mrf.mxu0
    %793 = vdwg.mxu0
    %vm794 = vcmask 515072
    %v795 = vsel %vm794, %v360, -inf
    %796 = vmax.xlane.f32.xlu0 %v795
    %v797 = vpop.xlane.xlu0 %796
    %v798 = vsel %vm794, %v365, -inf
    %799 = vmax.xlane.f32.xlu0 %v798
    %v800 = vpop.xlane.xlu0 %799
    %v801 = vsel %vm794, %v370, -inf
    %802 = vmax.xlane.f32.xlu0 %v801
    %v803 = vpop.xlane.xlu0 %802
    %v804 = vsel %vm794, %v375, -inf
    %805 = vmax.xlane.f32.xlu0 %v804
    %v806 = vpop.xlane.xlu0 %805
    %v807 = vsel %vm794, %v380, -inf
    %808 = vmax.xlane.f32.xlu0 %v807
    %v809 = vpop.xlane.xlu0 %808
    %v810 = vsel %vm794, %v385, -inf
    %811 = vmax.xlane.f32.xlu0 %v810
    %v812 = vpop.xlane.xlu0 %811
    %v813 = vsel %vm794, %v390, -inf
    %814 = vmax.xlane.f32.xlu0 %v813
    %v815 = vpop.xlane.xlu0 %814
    %vm816 = vcmask 514048
    %v817 = vsel %vm816, %v395, -inf
    %818 = vmax.xlane.f32.xlu0 %v817
    %v819 = vpop.xlane.xlu0 %818
    %v820 = vsel %vm794, %v492, -inf
    %821 = vmax.xlane.f32.xlu0 %v820
    %v822 = vpop.xlane.xlu0 %821
    %v823 = vsel %vm794, %v497, -inf
    %824 = vmax.xlane.f32.xlu0 %v823
    %v825 = vpop.xlane.xlu0 %824
    %v826 = vsel %vm794, %v502, -inf
    %827 = vmax.xlane.f32.xlu0 %v826
    %v828 = vpop.xlane.xlu0 %827
    %v829 = vsel %vm794, %v507, -inf
    %830 = vmax.xlane.f32.xlu0 %v829
    %v831 = vpop.xlane.xlu0 %830
    %v832 = vsel %vm794, %v512, -inf
    %833 = vmax.xlane.f32.xlu0 %v832
    %v834 = vpop.xlane.xlu0 %833
    %v835 = vsel %vm794, %v517, -inf
    %836 = vmax.xlane.f32.xlu0 %v835
    %v837 = vpop.xlane.xlu0 %836
    %v838 = vsel %vm794, %v522, -inf
    %839 = vmax.xlane.f32.xlu0 %v838
    %v840 = vpop.xlane.xlu0 %839
    %v841 = vsel %vm816, %v527, -inf
    %842 = vmax.xlane.f32.xlu0 %v841
    %v843 = vpop.xlane.xlu0 %842
    %v844 = vsel %vm794, %v624, -inf
    %845 = vmax.xlane.f32.xlu0 %v844
    %v846 = vpop.xlane.xlu0 %845
    %v847 = vsel %vm794, %v629, -inf
    %848 = vmax.xlane.f32.xlu0 %v847
    %v849 = vpop.xlane.xlu0 %848
    %v850 = vsel %vm794, %v634, -inf
    %851 = vmax.xlane.f32.xlu0 %v850
    %v852 = vpop.xlane.xlu0 %851
    %v853 = vsel %vm794, %v639, -inf
    %854 = vmax.xlane.f32.xlu0 %v853
    %v855 = vpop.xlane.xlu0 %854
    %v856 = vsel %vm794, %v644, -inf
    %857 = vmax.xlane.f32.xlu0 %v856
    %v858 = vpop.xlane.xlu0 %857
    %v859 = vsel %vm794, %v649, -inf
    %860 = vmax.xlane.f32.xlu0 %v859
    %v861 = vpop.xlane.xlu0 %860
    %v862 = vsel %vm794, %v654, -inf
    %863 = vmax.xlane.f32.xlu0 %v862
    %v864 = vpop.xlane.xlu0 %863
    %v865 = vsel %vm816, %v659, -inf
    %866 = vmax.xlane.f32.xlu0 %v865
    %v867 = vpop.xlane.xlu0 %866
    %v868 = vsel %vm794, %v756, -inf
    %869 = vmax.xlane.f32.xlu0 %v868
    %v870 = vpop.xlane.xlu0 %869
    %v871 = vsel %vm794, %v761, -inf
    %872 = vmax.xlane.f32.xlu0 %v871
    %v873 = vpop.xlane.xlu0 %872
    %v874 = vsel %vm794, %v766, -inf
    %875 = vmax.xlane.f32.xlu0 %v874
    %v876 = vpop.xlane.xlu0 %875
    %v877 = vsel %vm794, %v771, -inf
    %878 = vmax.xlane.f32.xlu0 %v877
    %v879 = vpop.xlane.xlu0 %878
    %v880 = vsel %vm794, %v776, -inf
    %881 = vmax.xlane.f32.xlu0 %v880
    %v882 = vpop.xlane.xlu0 %881
    %v883 = vsel %vm794, %v781, -inf
    %884 = vmax.xlane.f32.xlu0 %v883
    %v885 = vpop.xlane.xlu0 %884
    %v886 = vsel %vm794, %v786, -inf
    %887 = vmax.xlane.f32.xlu0 %v886
    %v888 = vpop.xlane.xlu0 %887
    %v889 = vsel %vm816, %v791, -inf
    %890 = vmax.xlane.f32.xlu0 %v889
    %v891 = vpop.xlane.xlu0 %890
    %v892 = vsub.f32 %v360, %v797
    %v893 = vsub.f32 %v365, %v800
    %v894 = vsub.f32 %v370, %v803
    %v895 = vsub.f32 %v375, %v806
    %v896 = vsub.f32 %v380, %v809
    %v897 = vsub.f32 %v385, %v812
    %v898 = vsub.f32 %v390, %v815
    %v899 = vsub.f32 %v395, %v819
    %v900 = vsub.f32 %v492, %v822
    %v901 = vsub.f32 %v497, %v825
    %v902 = vsub.f32 %v502, %v828
    %v903 = vsub.f32 %v507, %v831
    %v904 = vsub.f32 %v512, %v834
    %v905 = vsub.f32 %v517, %v837
    %v906 = vsub.f32 %v522, %v840
    %v907 = vsub.f32 %v527, %v843
    %v908 = vsub.f32 %v624, %v846
    %v909 = vsub.f32 %v629, %v849
    %v910 = vsub.f32 %v634, %v852
    %v911 = vsub.f32 %v639, %v855
    %v912 = vsub.f32 %v644, %v858
    %v913 = vsub.f32 %v649, %v861
    %v914 = vsub.f32 %v654, %v864
    %v915 = vsub.f32 %v659, %v867
    %v916 = vsub.f32 %v756, %v870
    %v917 = vsub.f32 %v761, %v873
    %v918 = vsub.f32 %v766, %v876
    %v919 = vsub.f32 %v771, %v879
    %v920 = vsub.f32 %v776, %v882
    %v921 = vsub.f32 %v781, %v885
    %v922 = vsub.f32 %v786, %v888
    %v923 = vsub.f32 %v791, %v891
    %v924 = vmul.f32 %v892, 1.442695
    %v925 = vpow.pop %v924
    %v926 = vmul.f32 %v893, 1.442695
    %v927 = vpow.pop %v926
    %v928 = vmul.f32 %v894, 1.442695
    %v929 = vpow.pop %v928
    %v930 = vmul.f32 %v895, 1.442695
    %v931 = vpow.pop %v930
    %v932 = vmul.f32 %v896, 1.442695
    %v933 = vpow.pop %v932
    %v934 = vmul.f32 %v897, 1.442695
    %v935 = vpow.pop %v934
    %v936 = vmul.f32 %v898, 1.442695
    %v937 = vpow.pop %v936
    %v938 = vmul.f32 %v899, 1.442695
    %v939 = vpow.pop %v938
    %v940 = vmul.f32 %v900, 1.442695
    %v941 = vpow.pop %v940
    %v942 = vmul.f32 %v901, 1.442695
    %v943 = vpow.pop %v942
    %v944 = vmul.f32 %v902, 1.442695
    %v945 = vpow.pop %v944
    %v946 = vmul.f32 %v903, 1.442695
    %v947 = vpow.pop %v946
    %v948 = vmul.f32 %v904, 1.442695
    %v949 = vpow.pop %v948
    %v950 = vmul.f32 %v905, 1.442695
    %v951 = vpow.pop %v950
    %v952 = vmul.f32 %v906, 1.442695
    %v953 = vpow.pop %v952
    %v954 = vmul.f32 %v907, 1.442695
    %v955 = vpow.pop %v954
    %v956 = vmul.f32 %v908, 1.442695
    %v957 = vpow.pop %v956
    %v958 = vmul.f32 %v909, 1.442695
    %v959 = vpow.pop %v958
    %v960 = vmul.f32 %v910, 1.442695
    %v961 = vpow.pop %v960
    %v962 = vmul.f32 %v911, 1.442695
    %v963 = vpow.pop %v962
    %v964 = vmul.f32 %v912, 1.442695
    %v965 = vpow.pop %v964
    %v966 = vmul.f32 %v913, 1.442695
    %v967 = vpow.pop %v966
    %v968 = vmul.f32 %v914, 1.442695
    %v969 = vpow.pop %v968
    %v970 = vmul.f32 %v915, 1.442695
    %v971 = vpow.pop %v970
    %v972 = vmul.f32 %v916, 1.442695
    %v973 = vpow.pop %v972
    %v974 = vmul.f32 %v917, 1.442695
    %v975 = vpow.pop %v974
    %v976 = vmul.f32 %v918, 1.442695
    %v977 = vpow.pop %v976
    %v978 = vmul.f32 %v919, 1.442695
    %v979 = vpow.pop %v978
    %v980 = vmul.f32 %v920, 1.442695
    %v981 = vpow.pop %v980
    %v982 = vmul.f32 %v921, 1.442695
    %v983 = vpow.pop %v982
    %v984 = vmul.f32 %v922, 1.442695
    %v985 = vpow.pop %v984
    %v986 = vmul.f32 %v923, 1.442695
    %v987 = vpow.pop %v986
    %v988 = vsel %vm794, %v925, 0.0
    %989 = vadd.xlane.f32.xlu0 %v988
    %v990 = vpop.xlane.xlu0 %989
    %v991 = vsel %vm794, %v927, 0.0
    %992 = vadd.xlane.f32.xlu0 %v991
    %v993 = vpop.xlane.xlu0 %992
    %v994 = vsel %vm794, %v929, 0.0
    %995 = vadd.xlane.f32.xlu0 %v994
    %v996 = vpop.xlane.xlu0 %995
    %v997 = vsel %vm794, %v931, 0.0
    %998 = vadd.xlane.f32.xlu0 %v997
    %v999 = vpop.xlane.xlu0 %998
    %v1000 = vsel %vm794, %v933, 0.0
    %1001 = vadd.xlane.f32.xlu0 %v1000
    %v1002 = vpop.xlane.xlu0 %1001
    %v1003 = vsel %vm794, %v935, 0.0
    %1004 = vadd.xlane.f32.xlu0 %v1003
    %v1005 = vpop.xlane.xlu0 %1004
    %v1006 = vsel %vm794, %v937, 0.0
    %1007 = vadd.xlane.f32.xlu0 %v1006
    %v1008 = vpop.xlane.xlu0 %1007
    %v1009 = vsel %vm816, %v939, 0.0
    %1010 = vadd.xlane.f32.xlu0 %v1009
    %v1011 = vpop.xlane.xlu0 %1010
    %v1012 = vsel %vm794, %v941, 0.0
    %1013 = vadd.xlane.f32.xlu0 %v1012
    %v1014 = vpop.xlane.xlu0 %1013
    %v1015 = vsel %vm794, %v943, 0.0
    %1016 = vadd.xlane.f32.xlu0 %v1015
    %v1017 = vpop.xlane.xlu0 %1016
    %v1018 = vsel %vm794, %v945, 0.0
    %1019 = vadd.xlane.f32.xlu0 %v1018
    %v1020 = vpop.xlane.xlu0 %1019
    %v1021 = vsel %vm794, %v947, 0.0
    %1022 = vadd.xlane.f32.xlu0 %v1021
    %v1023 = vpop.xlane.xlu0 %1022
    %v1024 = vsel %vm794, %v949, 0.0
    %1025 = vadd.xlane.f32.xlu0 %v1024
    %v1026 = vpop.xlane.xlu0 %1025
    %v1027 = vsel %vm794, %v951, 0.0
    %1028 = vadd.xlane.f32.xlu0 %v1027
    %v1029 = vpop.xlane.xlu0 %1028
    %v1030 = vsel %vm794, %v953, 0.0
    %1031 = vadd.xlane.f32.xlu0 %v1030
    %v1032 = vpop.xlane.xlu0 %1031
    %v1033 = vsel %vm816, %v955, 0.0
    %1034 = vadd.xlane.f32.xlu0 %v1033
    %v1035 = vpop.xlane.xlu0 %1034
    %v1036 = vsel %vm794, %v957, 0.0
    %1037 = vadd.xlane.f32.xlu0 %v1036
    %v1038 = vpop.xlane.xlu0 %1037
    %v1039 = vsel %vm794, %v959, 0.0
    %1040 = vadd.xlane.f32.xlu0 %v1039
    %v1041 = vpop.xlane.xlu0 %1040
    %v1042 = vsel %vm794, %v961, 0.0
    %1043 = vadd.xlane.f32.xlu0 %v1042
    %v1044 = vpop.xlane.xlu0 %1043
    %v1045 = vsel %vm794, %v963, 0.0
    %1046 = vadd.xlane.f32.xlu0 %v1045
    %v1047 = vpop.xlane.xlu0 %1046
    %v1048 = vsel %vm794, %v965, 0.0
    %1049 = vadd.xlane.f32.xlu0 %v1048
    %v1050 = vpop.xlane.xlu0 %1049
    %v1051 = vsel %vm794, %v967, 0.0
    %1052 = vadd.xlane.f32.xlu0 %v1051
    %v1053 = vpop.xlane.xlu0 %1052
    %v1054 = vsel %vm794, %v969, 0.0
    %1055 = vadd.xlane.f32.xlu0 %v1054
    %v1056 = vpop.xlane.xlu0 %1055
    %v1057 = vsel %vm816, %v971, 0.0
    %1058 = vadd.xlane.f32.xlu0 %v1057
    %v1059 = vpop.xlane.xlu0 %1058
    %v1060 = vsel %vm794, %v973, 0.0
    %1061 = vadd.xlane.f32.xlu0 %v1060
    %v1062 = vpop.xlane.xlu0 %1061
    %v1063 = vsel %vm794, %v975, 0.0
    %1064 = vadd.xlane.f32.xlu0 %v1063
    %v1065 = vpop.xlane.xlu0 %1064
    %v1066 = vsel %vm794, %v977, 0.0
    %1067 = vadd.xlane.f32.xlu0 %v1066
    %v1068 = vpop.xlane.xlu0 %1067
    %v1069 = vsel %vm794, %v979, 0.0
    %1070 = vadd.xlane.f32.xlu0 %v1069
    %v1071 = vpop.xlane.xlu0 %1070
    %v1072 = vsel %vm794, %v981, 0.0
    %1073 = vadd.xlane.f32.xlu0 %v1072
    %v1074 = vpop.xlane.xlu0 %1073
    %v1075 = vsel %vm794, %v983, 0.0
    %1076 = vadd.xlane.f32.xlu0 %v1075
    %v1077 = vpop.xlane.xlu0 %1076
    %v1078 = vsel %vm794, %v985, 0.0
    %1079 = vadd.xlane.f32.xlu0 %v1078
    %v1080 = vpop.xlane.xlu0 %1079
    %v1081 = vsel %vm816, %v987, 0.0
    %1082 = vadd.xlane.f32.xlu0 %v1081
    %v1083 = vpop.xlane.xlu0 %1082
    %s1084 = scalar_lea.vmem [#allocation2], 128
    %v1085 = vld [vmem:[%s1084] sm:$0xff]
    %v1086 = vld [vmem:[%s1084 + $0x8] sm:$0xff]
    %v1087 = vld [vmem:[%s1084 + $0x10] sm:$0xff]
    %v1088 = vld [vmem:[%s1084 + $0x18] sm:$0xff]
    %v1089 = vld [vmem:[%s1084 + $0x20] sm:$0xff]
    %v1090 = vld [vmem:[%s1084 + $0x28] sm:$0xff]
    %v1091 = vld [vmem:[%s1084 + $0x30] sm:$0xff]
    %v1092 = vld [vmem:[%s1084 + $0x38] sm:$0x7f]
    %v1093 = vmul.f32 %v83, %v1085
    %v1094 = vmul.f32 %v83, %v1086
    %v1095 = vmul.f32 %v83, %v1087
    %v1096 = vmul.f32 %v83, %v1088
    %v1097 = vmul.f32 %v83, %v1089
    %v1098 = vmul.f32 %v83, %v1090
    %v1099 = vmul.f32 %v83, %v1091
    %v1100 = vmul.f32 %v83, %v1092
    %v1101 = vmul.f32 %v87, %v1085
    %v1102 = vmul.f32 %v87, %v1086
    %v1103 = vmul.f32 %v87, %v1087
    %v1104 = vmul.f32 %v87, %v1088
    %v1105 = vmul.f32 %v87, %v1089
    %v1106 = vmul.f32 %v87, %v1090
    %v1107 = vmul.f32 %v87, %v1091
    %v1108 = vmul.f32 %v87, %v1092
    %v1109 = vmul.f32 %v91, %v1085
    %v1110 = vmul.f32 %v91, %v1086
    %v1111 = vmul.f32 %v91, %v1087
    %v1112 = vmul.f32 %v91, %v1088
    %v1113 = vmul.f32 %v91, %v1089
    %v1114 = vmul.f32 %v91, %v1090
    %v1115 = vmul.f32 %v91, %v1091
    %v1116 = vmul.f32 %v91, %v1092
    %v1117 = vmul.f32 %v95, %v1085
    %v1118 = vmul.f32 %v95, %v1086
    %v1119 = vmul.f32 %v95, %v1087
    %v1120 = vmul.f32 %v95, %v1088
    %v1121 = vmul.f32 %v95, %v1089
    %v1122 = vmul.f32 %v95, %v1090
    %v1123 = vmul.f32 %v95, %v1091
    %v1124 = vmul.f32 %v95, %v1092
    %s1125 = scalar_lea.vmem [#allocation2], 192
    %v1126 = vld [vmem:[%s1125] sm:$0xff]
    %v1127 = vld [vmem:[%s1125 + $0x8] sm:$0xff]
    %v1128 = vld [vmem:[%s1125 + $0x10] sm:$0xff]
    %v1129 = vld [vmem:[%s1125 + $0x18] sm:$0xff]
    %v1130 = vld [vmem:[%s1125 + $0x20] sm:$0xff]
    %v1131 = vld [vmem:[%s1125 + $0x28] sm:$0xff]
    %v1132 = vld [vmem:[%s1125 + $0x30] sm:$0xff]
    %v1133 = vld [vmem:[%s1125 + $0x38] sm:$0x7f]
    %v1134 = vadd.f32 %v1093, %v1126
    %v1135 = vadd.f32 %v1094, %v1127
    %v1136 = vadd.f32 %v1095, %v1128
    %v1137 = vadd.f32 %v1096, %v1129
    %v1138 = vadd.f32 %v1097, %v1130
    %v1139 = vadd.f32 %v1098, %v1131
    %v1140 = vadd.f32 %v1099, %v1132
    %v1141 = vadd.f32 %v1100, %v1133
    %v1142 = vadd.f32 %v1101, %v1126
    %v1143 = vadd.f32 %v1102, %v1127
    %v1144 = vadd.f32 %v1103, %v1128
    %v1145 = vadd.f32 %v1104, %v1129
    %v1146 = vadd.f32 %v1105, %v1130
    %v1147 = vadd.f32 %v1106, %v1131
    %v1148 = vadd.f32 %v1107, %v1132
    %v1149 = vadd.f32 %v1108, %v1133
    %v1150 = vadd.f32 %v1109, %v1126
    %v1151 = vadd.f32 %v1110, %v1127
    %v1152 = vadd.f32 %v1111, %v1128
    %v1153 = vadd.f32 %v1112, %v1129
    %v1154 = vadd.f32 %v1113, %v1130
    %v1155 = vadd.f32 %v1114, %v1131
    %v1156 = vadd.f32 %v1115, %v1132
    %v1157 = vadd.f32 %v1116, %v1133
    %v1158 = vadd.f32 %v1117, %v1126
    %v1159 = vadd.f32 %v1118, %v1127
    %v1160 = vadd.f32 %v1119, %v1128
    %v1161 = vadd.f32 %v1120, %v1129
    %v1162 = vadd.f32 %v1121, %v1130
    %v1163 = vadd.f32 %v1122, %v1131
    %v1164 = vadd.f32 %v1123, %v1132
    %v1165 = vadd.f32 %v1124, %v1133
    %v1166 = vsel %vm264, %v1134, 0.0
    %1167 = vadd.xlane.f32.xlu0 %v1166
    %v1168 = vpop.xlane.xlu0 %1167
    %v1169 = vsel %vm264, %v1135, 0.0
    %1170 = vadd.xlane.f32.xlu0 %v1169
    %v1171 = vpop.xlane.xlu0 %1170
    %v1172 = vsel %vm264, %v1136, 0.0
    %1173 = vadd.xlane.f32.xlu0 %v1172
    %v1174 = vpop.xlane.xlu0 %1173
    %v1175 = vsel %vm264, %v1137, 0.0
    %1176 = vadd.xlane.f32.xlu0 %v1175
    %v1177 = vpop.xlane.xlu0 %1176
    %v1178 = vsel %vm264, %v1138, 0.0
    %1179 = vadd.xlane.f32.xlu0 %v1178
    %v1180 = vpop.xlane.xlu0 %1179
    %v1181 = vsel %vm264, %v1139, 0.0
    %1182 = vadd.xlane.f32.xlu0 %v1181
    %v1183 = vpop.xlane.xlu0 %1182
    %v1184 = vsel %vm264, %v1140, 0.0
    %1185 = vadd.xlane.f32.xlu0 %v1184
    %v1186 = vpop.xlane.xlu0 %1185
    %vm1187 = vcmask 153600
    %v1188 = vsel %vm1187, %v1141, 0.0
    %1189 = vadd.xlane.f32.xlu0 %v1188
    %v1190 = vpop.xlane.xlu0 %1189
    %v1191 = vsel %vm264, %v1142, 0.0
    %1192 = vadd.xlane.f32.xlu0 %v1191
    %v1193 = vpop.xlane.xlu0 %1192
    %v1194 = vsel %vm264, %v1143, 0.0
    %1195 = vadd.xlane.f32.xlu0 %v1194
    %v1196 = vpop.xlane.xlu0 %1195
    %v1197 = vsel %vm264, %v1144, 0.0
    %1198 = vadd.xlane.f32.xlu0 %v1197
    %v1199 = vpop.xlane.xlu0 %1198
    %v1200 = vsel %vm264, %v1145, 0.0
    %1201 = vadd.xlane.f32.xlu0 %v1200
    %v1202 = vpop.xlane.xlu0 %1201
    %v1203 = vsel %vm264, %v1146, 0.0
    %1204 = vadd.xlane.f32.xlu0 %v1203
    %v1205 = vpop.xlane.xlu0 %1204
    %v1206 = vsel %vm264, %v1147, 0.0
    %1207 = vadd.xlane.f32.xlu0 %v1206
    %v1208 = vpop.xlane.xlu0 %1207
    %v1209 = vsel %vm264, %v1148, 0.0
    %1210 = vadd.xlane.f32.xlu0 %v1209
    %v1211 = vpop.xlane.xlu0 %1210
    %v1212 = vsel %vm1187, %v1149, 0.0
    %1213 = vadd.xlane.f32.xlu0 %v1212
    %v1214 = vpop.xlane.xlu0 %1213
    %v1215 = vsel %vm264, %v1150, 0.0
    %1216 = vadd.xlane.f32.xlu0 %v1215
    %v1217 = vpop.xlane.xlu0 %1216
    %v1218 = vsel %vm264, %v1151, 0.0
    %1219 = vadd.xlane.f32.xlu0 %v1218
    %v1220 = vpop.xlane.xlu0 %1219
    %v1221 = vsel %vm264, %v1152, 0.0
    %1222 = vadd.xlane.f32.xlu0 %v1221
    %v1223 = vpop.xlane.xlu0 %1222
    %v1224 = vsel %vm264, %v1153, 0.0
    %1225 = vadd.xlane.f32.xlu0 %v1224
    %v1226 = vpop.xlane.xlu0 %1225
    %v1227 = vsel %vm264, %v1154, 0.0
    %1228 = vadd.xlane.f32.xlu0 %v1227
    %v1229 = vpop.xlane.xlu0 %1228
    %v1230 = vsel %vm264, %v1155, 0.0
    %1231 = vadd.xlane.f32.xlu0 %v1230
    %v1232 = vpop.xlane.xlu0 %1231
    %v1233 = vsel %vm264, %v1156, 0.0
    %1234 = vadd.xlane.f32.xlu0 %v1233
    %v1235 = vpop.xlane.xlu0 %1234
    %v1236 = vsel %vm1187, %v1157, 0.0
    %1237 = vadd.xlane.f32.xlu0 %v1236
    %v1238 = vpop.xlane.xlu0 %1237
    %v1239 = vsel %vm264, %v1158, 0.0
    %1240 = vadd.xlane.f32.xlu0 %v1239
    %v1241 = vpop.xlane.xlu0 %1240
    %v1242 = vsel %vm264, %v1159, 0.0
    %1243 = vadd.xlane.f32.xlu0 %v1242
    %v1244 = vpop.xlane.xlu0 %1243
    %v1245 = vsel %vm264, %v1160, 0.0
    %1246 = vadd.xlane.f32.xlu0 %v1245
    %v1247 = vpop.xlane.xlu0 %1246
    %v1248 = vsel %vm264, %v1161, 0.0
    %1249 = vadd.xlane.f32.xlu0 %v1248
    %v1250 = vpop.xlane.xlu0 %1249
    %v1251 = vsel %vm264, %v1162, 0.0
    %1252 = vadd.xlane.f32.xlu0 %v1251
    %v1253 = vpop.xlane.xlu0 %1252
    %v1254 = vsel %vm264, %v1163, 0.0
    %1255 = vadd.xlane.f32.xlu0 %v1254
    %v1256 = vpop.xlane.xlu0 %1255
    %v1257 = vsel %vm264, %v1164, 0.0
    %1258 = vadd.xlane.f32.xlu0 %v1257
    %v1259 = vpop.xlane.xlu0 %1258
    %v1260 = vsel %vm1187, %v1165, 0.0
    %1261 = vadd.xlane.f32.xlu0 %v1260
    %v1262 = vpop.xlane.xlu0 %1261
    %v1263 = vrcp.pop %v990
    %v1264 = vmul.f32 %v1168, %v1263
    %v1265 = vrcp.pop %v993
    %v1266 = vmul.f32 %v1171, %v1265
    %v1267 = vrcp.pop %v996
    %v1268 = vmul.f32 %v1174, %v1267
    %v1269 = vrcp.pop %v999
    %v1270 = vmul.f32 %v1177, %v1269
    %v1271 = vrcp.pop %v1002
    %v1272 = vmul.f32 %v1180, %v1271
    %v1273 = vrcp.pop %v1005
    %v1274 = vmul.f32 %v1183, %v1273
    %v1275 = vrcp.pop %v1008
    %v1276 = vmul.f32 %v1186, %v1275
    %v1277 = vrcp.pop %v1011
    %v1278 = vmul.f32 %v1190, %v1277
    %v1279 = vrcp.pop %v1014
    %v1280 = vmul.f32 %v1193, %v1279
    %v1281 = vrcp.pop %v1017
    %v1282 = vmul.f32 %v1196, %v1281
    %v1283 = vrcp.pop %v1020
    %v1284 = vmul.f32 %v1199, %v1283
    %v1285 = vrcp.pop %v1023
    %v1286 = vmul.f32 %v1202, %v1285
    %v1287 = vrcp.pop %v1026
    %v1288 = vmul.f32 %v1205, %v1287
    %v1289 = vrcp.pop %v1029
    %v1290 = vmul.f32 %v1208, %v1289
    %v1291 = vrcp.pop %v1032
    %v1292 = vmul.f32 %v1211, %v1291
    %v1293 = vrcp.pop %v1035
    %v1294 = vmul.f32 %v1214, %v1293
    %v1295 = vrcp.pop %v1038
    %v1296 = vmul.f32 %v1217, %v1295
    %v1297 = vrcp.pop %v1041
    %v1298 = vmul.f32 %v1220, %v1297
    %v1299 = vrcp.pop %v1044
    %v1300 = vmul.f32 %v1223, %v1299
    %v1301 = vrcp.pop %v1047
    %v1302 = vmul.f32 %v1226, %v1301
    %v1303 = vrcp.pop %v1050
    %v1304 = vmul.f32 %v1229, %v1303
    %v1305 = vrcp.pop %v1053
    %v1306 = vmul.f32 %v1232, %v1305
    %v1307 = vrcp.pop %v1056
    %v1308 = vmul.f32 %v1235, %v1307
    %v1309 = vrcp.pop %v1059
    %v1310 = vmul.f32 %v1238, %v1309
    %v1311 = vrcp.pop %v1062
    %v1312 = vmul.f32 %v1241, %v1311
    %v1313 = vrcp.pop %v1065
    %v1314 = vmul.f32 %v1244, %v1313
    %v1315 = vrcp.pop %v1068
    %v1316 = vmul.f32 %v1247, %v1315
    %v1317 = vrcp.pop %v1071
    %v1318 = vmul.f32 %v1250, %v1317
    %v1319 = vrcp.pop %v1074
    %v1320 = vmul.f32 %v1253, %v1319
    %v1321 = vrcp.pop %v1077
    %v1322 = vmul.f32 %v1256, %v1321
    %v1323 = vrcp.pop %v1080
    %v1324 = vmul.f32 %v1259, %v1323
    %v1325 = vrcp.pop %v1083
    %v1326 = vmul.f32 %v1262, %v1325
    %v1327 = vmul.f32 %v925, %v1264
    %v1328 = vmul.f32 %v927, %v1266
    %v1329 = vmul.f32 %v929, %v1268
    %v1330 = vmul.f32 %v931, %v1270
    %v1331 = vmul.f32 %v933, %v1272
    %v1332 = vmul.f32 %v935, %v1274
    %v1333 = vmul.f32 %v937, %v1276
    %v1334 = vmul.f32 %v939, %v1278
    %v1335 = vmul.f32 %v941, %v1280
    %v1336 = vmul.f32 %v943, %v1282
    %v1337 = vmul.f32 %v945, %v1284
    %v1338 = vmul.f32 %v947, %v1286
    %v1339 = vmul.f32 %v949, %v1288
    %v1340 = vmul.f32 %v951, %v1290
    %v1341 = vmul.f32 %v953, %v1292
    %v1342 = vmul.f32 %v955, %v1294
    %v1343 = vmul.f32 %v957, %v1296
    %v1344 = vmul.f32 %v959, %v1298
    %v1345 = vmul.f32 %v961, %v1300
    %v1346 = vmul.f32 %v963, %v1302
    %v1347 = vmul.f32 %v965, %v1304
    %v1348 = vmul.f32 %v967, %v1306
    %v1349 = vmul.f32 %v969, %v1308
    %v1350 = vmul.f32 %v971, %v1310
    %v1351 = vmul.f32 %v973, %v1312
    %v1352 = vmul.f32 %v975, %v1314
    %v1353 = vmul.f32 %v977, %v1316
    %v1354 = vmul.f32 %v979, %v1318
    %v1355 = vmul.f32 %v981, %v1320
    %v1356 = vmul.f32 %v983, %v1322
    %v1357 = vmul.f32 %v985, %v1324
    %v1358 = vmul.f32 %v987, %v1326
    %v1359 = vsel %vm794, %v1327, 0.0
    %v1360 = vsel %vm794, %v1328, 0.0
    %v1361 = vadd.f32 %v1359, %v1360
    %v1362 = vsel %vm794, %v1329, 0.0
    %v1363 = vadd.f32 %v1361, %v1362
    %v1364 = vsel %vm794, %v1330, 0.0
    %v1365 = vadd.f32 %v1363, %v1364
    %v1366 = vsel %vm794, %v1331, 0.0
    %v1367 = vadd.f32 %v1365, %v1366
    %v1368 = vsel %vm794, %v1332, 0.0
    %v1369 = vadd.f32 %v1367, %v1368
    %v1370 = vsel %vm794, %v1333, 0.0
    %v1371 = vadd.f32 %v1369, %v1370
    %v1372 = vsel %vm816, %v1334, 0.0
    %v1373 = vadd.f32 %v1371, %v1372
    %v1374 = vrot.slane %v1373, 4
    %v1375 = vadd.f32 %v1373, %v1374
    %v1376 = vrot.slane %v1375, 2
    %v1377 = vadd.f32 %v1375, %v1376
    %v1378 = vrot.slane %v1377, 1
    %v1379 = vadd.f32 %v1377, %v1378
    %v1380 = vsel %vm794, %v1335, 0.0
    %v1381 = vsel %vm794, %v1336, 0.0
    %v1382 = vadd.f32 %v1380, %v1381
    %v1383 = vsel %vm794, %v1337, 0.0
    %v1384 = vadd.f32 %v1382, %v1383
    %v1385 = vsel %vm794, %v1338, 0.0
    %v1386 = vadd.f32 %v1384, %v1385
    %v1387 = vsel %vm794, %v1339, 0.0
    %v1388 = vadd.f32 %v1386, %v1387
    %v1389 = vsel %vm794, %v1340, 0.0
    %v1390 = vadd.f32 %v1388, %v1389
    %v1391 = vsel %vm794, %v1341, 0.0
    %v1392 = vadd.f32 %v1390, %v1391
    %v1393 = vsel %vm816, %v1342, 0.0
    %v1394 = vadd.f32 %v1392, %v1393
    %v1395 = vrot.slane %v1394, 4
    %v1396 = vadd.f32 %v1394, %v1395
    %v1397 = vrot.slane %v1396, 2
    %v1398 = vadd.f32 %v1396, %v1397
    %v1399 = vrot.slane %v1398, 1
    %v1400 = vadd.f32 %v1398, %v1399
    %v1401 = vsel %vm794, %v1343, 0.0
    %v1402 = vsel %vm794, %v1344, 0.0
    %v1403 = vadd.f32 %v1401, %v1402
    %v1404 = vsel %vm794, %v1345, 0.0
    %v1405 = vadd.f32 %v1403, %v1404
    %v1406 = vsel %vm794, %v1346, 0.0
    %v1407 = vadd.f32 %v1405, %v1406
    %v1408 = vsel %vm794, %v1347, 0.0
    %v1409 = vadd.f32 %v1407, %v1408
    %v1410 = vsel %vm794, %v1348, 0.0
    %v1411 = vadd.f32 %v1409, %v1410
    %v1412 = vsel %vm794, %v1349, 0.0
    %v1413 = vadd.f32 %v1411, %v1412
    %v1414 = vsel %vm816, %v1350, 0.0
    %v1415 = vadd.f32 %v1413, %v1414
    %v1416 = vrot.slane %v1415, 4
    %v1417 = vadd.f32 %v1415, %v1416
    %v1418 = vrot.slane %v1417, 2
    %v1419 = vadd.f32 %v1417, %v1418
    %v1420 = vrot.slane %v1419, 1
    %v1421 = vadd.f32 %v1419, %v1420
    %v1422 = vsel %vm794, %v1351, 0.0
    %v1423 = vsel %vm794, %v1352, 0.0
    %v1424 = vadd.f32 %v1422, %v1423
    %v1425 = vsel %vm794, %v1353, 0.0
    %v1426 = vadd.f32 %v1424, %v1425
    %v1427 = vsel %vm794, %v1354, 0.0
    %v1428 = vadd.f32 %v1426, %v1427
    %v1429 = vsel %vm794, %v1355, 0.0
    %v1430 = vadd.f32 %v1428, %v1429
    %v1431 = vsel %vm794, %v1356, 0.0
    %v1432 = vadd.f32 %v1430, %v1431
    %v1433 = vsel %vm794, %v1357, 0.0
    %v1434 = vadd.f32 %v1432, %v1433
    %v1435 = vsel %vm816, %v1358, 0.0
    %v1436 = vadd.f32 %v1434, %v1435
    %v1437 = vrot.slane %v1436, 4
    %v1438 = vadd.f32 %v1436, %v1437
    %v1439 = vrot.slane %v1438, 2
    %v1440 = vadd.f32 %v1438, %v1439
    %v1441 = vrot.slane %v1440, 1
    %v1442 = vadd.f32 %v1440, %v1441
    %v1443 = vld [vmem:[%s4] sm:$0xff]
    %v1444 = vld [vmem:[%s4 + $0x8] sm:$0xff]
    %v1445 = vld [vmem:[%s4 + $0x10] sm:$0xff]
    %v1446 = vld [vmem:[%s4 + $0x18] sm:$0xff]
    %v1447 = vld [vmem:[%s4 + $0x20] sm:$0xff]
    %v1448 = vld [vmem:[%s4 + $0x28] sm:$0xff]
    %v1449 = vld [vmem:[%s4 + $0x30] sm:$0xff]
    %v1450 = vld [vmem:[%s4 + $0x38] sm:$0x7f]
    %v1451 = vlaneseq
    %v1452 = vshrl.u32 %v1451, 7
    %v1453 = vsub.s32 0, %v1452
    %v1454 = vrot.slane %v67, %v1453
    %vm1459 = vcmask 1041409
    %v1460 = vsel %vm1459, %v1400, %v1379
    %vm1461 = vcmask 1042434
    %v1462 = vsel %vm1461, %v1421, %v1460
    %vm1463 = vcmask 1043459
    %v1464 = vsel %vm1463, %v1442, %v1462
    %v1465 = vsel %vm794, %v1464, 0
    %vm1467 = vcmask 1046528
    %v1469 = vsel %vm1467, %v1450, 0
    %1471 = vmatprep.subr.mxu0 0.0
    %1472 = vmatpush1.msra.mxu0 0.0
    %1473 = vmatprep.subr.mxu0 0.0
    %1474 = vmatpush1.msra.mxu0 0.0
    %1475 = vmatprep.subr.mxu0 0.0
    %1476 = vmatpush1.msra.mxu0 0.0
    %1477 = vmatprep.subr.mxu0 0.0
    %1478 = vmatpush1.msra.mxu0 0.0
    %1479 = vmatprep.subr.mxu0 0.0
    %1480 = vmatpush1.msra.mxu0 0.0
    %1481 = vmatprep.subr.mxu0 0.0
    %1482 = vmatpush1.msra.mxu0 0.0
    %1483 = vmatprep.subr.mxu0 0.0
    %1484 = vmatpush1.msra.mxu0 0.0
    %1485 = vmatprep.subr.mxu0 0.0
    %1486 = vmatpush1.msra.mxu0 0.0
    %1487 = vmatprep.subr.mxu0 0.0
    %1488 = vmatpush1.msra.mxu0 %v1469
    %1489 = vmatprep.subr.mxu0 0.0
    %1490 = vmatpush1.msra.mxu0 %v1449
    %1491 = vmatprep.subr.mxu0 0.0
    %1492 = vmatpush1.msra.mxu0 %v1448
    %1493 = vmatprep.subr.mxu0 0.0
    %1494 = vmatpush1.msra.mxu0 %v1447
    %1495 = vmatprep.subr.mxu0 0.0
    %1496 = vmatpush1.msra.mxu0 %v1446
    %1497 = vmatprep.subr.mxu0 0.0
    %1498 = vmatpush1.msra.mxu0 %v1445
    %1499 = vmatprep.subr.mxu0 0.0
    %1500 = vmatpush1.msra.mxu0 %v1444
    %1501 = vmatprep.subr.mxu0 0.0
    %1502 = vmatpush1.msra.mxu0 %v1443
    %1503 = vmatprep.subr.mxu0 0.0
    %1504 = vmatpush2.msra.mxu0 0.0
    %1505 = vmatprep.subr.mxu0 0.0
    %1506 = vmatpush2.msra.mxu0 0.0
    %1507 = vmatprep.subr.mxu0 0.0
    %1508 = vmatpush2.msra.mxu0 0.0
    %1509 = vmatprep.subr.mxu0 0.0
    %1510 = vmatpush2.msra.mxu0 0.0
    %1511 = vmatprep.subr.mxu0 0.0
    %1512 = vmatpush2.msra.mxu0 0.0
    %1513 = vmatprep.subr.mxu0 0.0
    %1514 = vmatpush2.msra.mxu0 0.0
    %1515 = vmatprep.subr.mxu0 0.0
    %1516 = vmatpush2.msra.mxu0 0.0
    %1517 = vmatprep.subr.mxu0 0.0
    %1518 = vmatpush2.msra.mxu0 0.0
    %1519 = vmatprep.subr.mxu0 0.0
    %1520 = vmatpush2.msra.mxu0 0.0
    %1521 = vmatprep.subr.mxu0 0.0
    %1522 = vmatpush2.msra.mxu0 0.0
    %1523 = vmatprep.subr.mxu0 0.0
    %1524 = vmatpush2.msra.mxu0 0.0
    %1525 = vmatprep.subr.mxu0 0.0
    %1526 = vmatpush2.msra.mxu0 0.0
    %1527 = vmatprep.subr.mxu0 0.0
    %1528 = vmatpush2.msra.mxu0 0.0
    %1529 = vmatprep.subr.mxu0 0.0
    %1530 = vmatpush2.msra.mxu0 0.0
    %1531 = vmatprep.subr.mxu0 0.0
    %1532 = vmatpush2.msra.mxu0 0.0
    %1533 = vmatprep.subr.mxu0 0.0
    %1534 = vmatpush2.msra.mxu0 0.0
    %1535 = vmatprep.mubr.f32.mxu0 0.0
    %1536 = vmatmul.mubr.f32.gmra.mxu0 %v1465
    %v1537 = vpop.f32.mrf.mxu0
    %v1538 = vadd.f32 %v1454, %v1537
    %v1539 = vpop.f32.mrf.mxu0
    %1540 = vdwg.mxu0
    %v1541 = vmul.f32 %v1538, 0.5
    %v1542 = vmul.f32 %v1538, 0.70710677
    %v1543 = verf.f32.pop %v1542
    %v1544 = vadd.f32 %v1543, 1.0
    %v1545 = vmul.f32 %v1541, %v1544
    %v1546 = vlaneseq
    %v1547 = vshrl.u32 %v1546, 7
    %v1548 = vsub.s32 1, %v1547
    %v1549 = vrot.slane %v67, %v1548
    %v1550 = vmul.f32 %v1545, %v1549
    %vm1551 = vcmask 510976
    %v1552 = vsel %vm1551, %v1550, 0.0
    %1553 = vadd.xlane.f32.xlu0 %v1552
    %v1554 = vpop.xlane.xlu0 %1553
    %v1555 = vlaneseq
    %v1556 = vshrl.u32 %v1555, 7
    %v1557 = vsub.s32 2, %v1556
    %v1558 = vrot.slane %v67, %v1557
    %v1559 = vadd.f32 %v1554, %v1558
    %vm1560 = vcmask 3072
    %1561 = vst.msk [vmem:[%s6] sm:$0xf] %vm1560, %v1559
    // Predicated region
    $region34: #{attention_model_forward.1} parent=1 // pred_check
      _
    $region35: #{attention_model_forward.1} parent=1 // pred_check_branch
      %1563 = sbr.rel (0) target = $region37
    $region36: #{attention_model_forward.1} parent=1 // pred_region
      _
    $region37: #{attention_model_forward.1} parent=1 // pred_fallthru
      _
    // Predicated region
    $region38: #{attention_model_forward.1} parent=1 // pred_check
      _
    $region39: #{attention_model_forward.1} parent=1 // pred_check_branch
      %1565 = sbr.rel (0) target = $region41
    $region40: #{attention_model_forward.1} parent=1 // pred_region
      _
    $region41: #{attention_model_forward.1} parent=1 // pred_fallthru
      _
    %1566 = vsyncpa [#allocation3], 1
    %1567 = vsyncpa [#allocation5], 1

</llo_original>
